<compile_context>
chip_gen: v7x
topology: tpu7x:2x2x1
jax: 0.10.0
libtpu: 0.0.40
codegen_flags: <defaults>
</compile_context>

<pallas_src>
import jax
import jax.numpy as jnp
from jax.experimental import pallas as pl
from jax.experimental.pallas import tpu as pltpu


# ---------------------------------------------------------------------------
# Kernel
# ---------------------------------------------------------------------------
def fcmodel1_kernel(data_ref, w_in_ref, biases_ref, w_mid_ref, w_out_ref,
                    b_out_ref, out_ref):
    x = data_ref[...]                                             # [TB, 112]

    # Layer 1: fused block-diagonal (fc1 | fc2 | bn3∘fc7), then ReLU on all
    # branches (every branch applies ReLU after its first layer).
    h = jnp.dot(x, w_in_ref[...], preferred_element_type=jnp.float32)
    h = jnp.maximum(h + biases_ref[0:1, :], 0.0)                  # [TB, 64] f32

    # Layer 2: fused block-diagonal (bn1∘fc3 | fc6 | I_2). Dropout = identity
    # in eval mode. Per-branch activation via a lane-masked select:
    #   lanes  0:32 -> ReLU, lanes 32:48 -> sigmoid, lanes 48:50 -> passthrough
    #   (already >= 0, so ReLU is identity there), lanes 50:64 stay 0.
    g = jnp.dot(h.astype(w_mid_ref.dtype), w_mid_ref[...],
                preferred_element_type=jnp.float32)
    g = g + biases_ref[1:2, :]                                    # [TB, 64] f32
    lane = jax.lax.broadcasted_iota(jnp.int32, g.shape, dimension=1)
    sig_mask = (lane >= 32) & (lane < 48)
    # NOTE: exp runs on all 64 lanes (including non-sigmoid ones). For very
    # negative g it saturates to inf -> reciprocal gives 0, which is either
    # discarded by the lane mask or the correct saturated sigmoid limit.
    # No NaN risk — do not "fix" with a clamp in the hot path.
    # Both exp and the approximate reciprocal live in the EUP slot (free
    # relative to the DMA/MXU-bound loop).
    sig = pl.reciprocal(1.0 + jnp.exp(-g), approx=True)
    z = jnp.where(sig_mask, sig, jnp.maximum(g, 0.0))             # [TB, 64] f32

    # Layer 3: fc5 over the (implicit) concat — single padded matmul.
    out = jnp.dot(z.astype(w_out_ref.dtype), w_out_ref[...],
                  preferred_element_type=jnp.float32) + b_out_ref[...]
    out_ref[...] = out.astype(out_ref.dtype)                      # [TB, 2]


# ---------------------------------------------------------------------------
# Wrapper
# ---------------------------------------------------------------------------
def fcmodel1_forward(data, fused, *, block_b=4096, out_dtype=jnp.float32):
    """data: [B, 112]; fused: dict from build_fused_params().

    For best performance hand `data` over already in the same dtype as
    fused["w_in"] (bf16 path halves the dominant HBM read). The kernel accepts
    f32 or bf16 data either way — no wrapper-side astype/pad is performed,
    since each would be an extra full HBM pass over the [B, 112] array.

    Ragged last tile (TB not dividing B) is safe: rows are independent, OOB
    input rows read undefined values whose results are never stored (Pallas
    masks stores past B), so no host-side padding is needed.
    """
    B, F = data.shape
    assert F == 112
    assert block_b % 8 == 0

    if B <= 16:
        # Tiny batch: single block equal to the full dim (always legal).
        TB = B
    else:
        B8 = ((B + 7) // 8) * 8
        if B8 <= block_b:
            # Whole batch would fit in one tile: split into 2 tiles so both
            # v7x TensorCores get work (dimension_semantics="parallel").
            # Harmless on v5e/v6e (single TC) — tiles stay >= 8 rows.
            TB = ((B8 // 2 + 7) // 8) * 8
        else:
            # Large batch: big tiles so the ~0.35 us/step pipeline overhead is
            # negligible. Cap keeps the VMEM footprint (2x double-buffered
            # input + ~4 live (TB,64) f32 intermediates) well under 32 MiB.
            TB = min(block_b, 8192)
    n_blocks = pl.cdiv(B, TB)

    def w_spec(shape):                      # VMEM-resident across all steps
        return pl.BlockSpec(shape, lambda i: (0, 0))

    # NOTE: if a deployment is forced to tiny TB (latency-critical small B),
    # adding pipeline_mode=pl.Buffered(3) on the input spec recovers DMA
    # overlap; at TB>=2048 the default double buffer already hides it.
    out = pl.pallas_call(
        fcmodel1_kernel,
        out_shape=jax.ShapeDtypeStruct((B, 2), out_dtype),
        grid=(n_blocks,),
        in_specs=[
            pl.BlockSpec((TB, 112), lambda i: (i, 0)),   # batch-tiled input
            w_spec((112, 64)),                           # W_in
            w_spec((2, 64)),                             # packed biases (f32)
            w_spec((64, 64)),                            # W_mid
            w_spec((64, 2)),                             # W_out
            w_spec((1, 2)),                              # b_out (f32)
        ],
        out_specs=pl.BlockSpec((TB, 2), lambda i: (i, 0)),
        compiler_params=pltpu.CompilerParams(
            dimension_semantics=("parallel",),
            # Raise v5e's 16 MiB scoped default so large TB keeps full
            # pipeline depth; matches v6e/v7x defaults and stays well under
            # v7x's 64 MiB physical VMEM.
            vmem_limit_bytes=32 * 1024 * 1024,
        ),
    )(data, fused["w_in"], fused["biases"], fused["w_mid"],
      fused["w_out"], fused["b_out"])

    return out


# ---------------------------------------------------------------------------
# Host-side fusion of raw (torch-layout) parameters
# ---------------------------------------------------------------------------
def build_fused_params(p, dtype=jnp.float32):
    eps = 1e-5
    # Fold eval-mode BatchNorm into the preceding Linear.
    s1 = p["bn1_gamma"] / jnp.sqrt(p["bn1_var"] + eps)
    t1 = p["bn1_beta"] - p["bn1_mean"] * s1
    s3 = p["bn3_gamma"] / jnp.sqrt(p["bn3_var"] + eps)
    t3 = p["bn3_beta"] - p["bn3_mean"] * s3
    w3f, b3f = p["w3"] * s1[None, :], p["b3"] * s1 + t1
    w7f, b7f = p["w7"] * s3[None, :], p["b7"] * s3 + t3

    w_in = jnp.zeros((112, 64), jnp.float32)
    w_in = w_in.at[0:52, 0:32].set(p["w1"])
    w_in = w_in.at[52:106, 32:48].set(p["w2"])
    w_in = w_in.at[106:112, 48:50].set(w7f)
    b_in = jnp.zeros((64,), jnp.float32)
    b_in = b_in.at[0:32].set(p["b1"]).at[32:48].set(p["b2"]).at[48:50].set(b7f)

    w_mid = jnp.zeros((64, 64), jnp.float32)
    w_mid = w_mid.at[0:32, 0:32].set(w3f)
    w_mid = w_mid.at[32:48, 32:48].set(p["w6"])
    w_mid = w_mid.at[48:50, 48:50].set(jnp.eye(2, dtype=jnp.float32))
    b_mid = jnp.zeros((64,), jnp.float32)
    b_mid = b_mid.at[0:32].set(b3f).at[32:48].set(p["b6"])

    w_out = jnp.zeros((64, 2), jnp.float32).at[0:50, :].set(p["w5"])

    return {
        "w_in": w_in.astype(dtype),
        "w_mid": w_mid.astype(dtype),
        "w_out": w_out.astype(dtype),
        "biases": jnp.stack([b_in, b_mid], axis=0),   # (2, 64) f32
        "b_out": p["b5"].reshape(1, 2),               # (1, 2)  f32
    }


# ---------------------------------------------------------------------------
# Raw parameter init (weights stored as (in, out) == torch W.T)
# ---------------------------------------------------------------------------
def init_params(key):
    def linear(k, fan_in, fan_out):
        k1, k2 = jax.random.split(k)
        bound = 1.0 / jnp.sqrt(fan_in)
        w = jax.random.uniform(k1, (fan_in, fan_out), jnp.float32, -bound, bound)
        b = jax.random.uniform(k2, (fan_out,), jnp.float32, -bound, bound)
        return w, b

    def bn(k, n):
        kg, kb, km, kv = jax.random.split(k, 4)
        return (jax.random.uniform(kg, (n,), jnp.float32, 0.5, 1.5),
                0.1 * jax.random.normal(kb, (n,), jnp.float32),
                0.1 * jax.random.normal(km, (n,), jnp.float32),
                jax.random.uniform(kv, (n,), jnp.float32, 0.5, 1.5))

    ks = jax.random.split(key, 8)
    w1, b1 = linear(ks[0], 52, 32)
    w2, b2 = linear(ks[1], 54, 16)
    w7, b7 = linear(ks[2], 6, 2)
    w3, b3 = linear(ks[3], 32, 32)
    w6, b6 = linear(ks[4], 16, 16)
    w5, b5 = linear(ks[5], 50, 2)
    g1, be1, m1, v1 = bn(ks[6], 32)
    g3, be3, m3, v3 = bn(ks[7], 2)

    return {
        "w1": w1, "b1": b1, "w2": w2, "b2": b2, "w7": w7, "b7": b7,
        "w3": w3, "b3": b3, "w6": w6, "b6": b6, "w5": w5, "b5": b5,
        "bn1_gamma": g1, "bn1_beta": be1, "bn1_mean": m1, "bn1_var": v1,
        "bn3_gamma": g3, "bn3_beta": be3, "bn3_mean": m3, "bn3_var": v3,
    }


def fcmodel1_ref(data, p):
    """Pure-JAX, un-fused reference of the original eval-mode forward."""
    eps = 1e-5
    d1, d2, d3 = data[:, :52], data[:, 52:106], data[:, 106:]
    x1 = jnp.maximum(d1 @ p["w1"] + p["b1"], 0.0)
    y1 = x1 @ p["w3"] + p["b3"]
    y1 = (y1 - p["bn1_mean"]) / jnp.sqrt(p["bn1_var"] + eps) * p["bn1_gamma"] + p["bn1_beta"]
    x1 = jnp.maximum(y1, 0.0)
    x2 = jnp.maximum(d2 @ p["w2"] + p["b2"], 0.0)
    x2 = 1.0 / (1.0 + jnp.exp(-(x2 @ p["w6"] + p["b6"])))
    y3 = d3 @ p["w7"] + p["b7"]
    y3 = (y3 - p["bn3_mean"]) / jnp.sqrt(p["bn3_var"] + eps) * p["bn3_gamma"] + p["bn3_beta"]
    x3 = jnp.maximum(y3, 0.0)
    x = jnp.concatenate([x1, x2, x3], axis=1)
    return x @ p["w5"] + p["b5"]


if __name__ == "__main__":
    key = jax.random.PRNGKey(0)
    kd, kp = jax.random.split(key)
    B = 512
    data = jax.random.normal(kd, (B, 112), jnp.float32)   # 52 + 54 + 6 = 112
    raw = init_params(kp)
    ref = fcmodel1_ref(data, raw)

    # f32 path (strict correctness check of the block-diagonal fusion).
    # Default block_b: for B=512 the wrapper picks TB=256, 2 tiles (v7x 2-TC).
    fused_f32 = build_fused_params(raw, dtype=jnp.float32)
    out_f32 = jax.block_until_ready(fcmodel1_forward(data, fused_f32))
    assert out_f32.shape == (B, 2)
    # Tolerance covers the EUP approximate reciprocal in the sigmoid.
    assert jnp.allclose(out_f32, ref, atol=5e-3, rtol=5e-3)

    # bf16 path: the *producer* hands over bf16 data (no wrapper-side astype),
    # halving the dominant [B, 112] HBM read on this mem-bound kernel.
    fused_bf16 = build_fused_params(raw, dtype=jnp.bfloat16)
    data_bf16 = data.astype(jnp.bfloat16)
    out_bf16 = jax.block_until_ready(fcmodel1_forward(data_bf16, fused_bf16))
    assert out_bf16.shape == (B, 2)
    assert jnp.allclose(out_bf16, ref, atol=5e-2, rtol=5e-2)

    print("KERNEL_OK")
</pallas_src>

<mosaic_0001>
module attributes {stable_mosaic.version = 11 : i64} {
  func.func @fcmodel1_kernel(%arg0: i32, %arg1: memref<256x112xf32, #tpu.memory_space<vmem>>, %arg2: memref<112x64xf32, #tpu.memory_space<vmem>>, %arg3: memref<2x64xf32, #tpu.memory_space<vmem>>, %arg4: memref<64x64xf32, #tpu.memory_space<vmem>>, %arg5: memref<64x2xf32, #tpu.memory_space<vmem>>, %arg6: memref<1x2xf32, #tpu.memory_space<vmem>>, %arg7: memref<256x2xf32, #tpu.memory_space<vmem>>) attributes {dimension_semantics = [#tpu.dimension_semantics<parallel>], iteration_bounds = array<i64: 2>, scalar_prefetch = 0 : i64, scratch_operands = 0 : i64, tpu.core_type = #tpu.core_type<tc>, window_params = [{transform_indices = @transform_0, window_bounds = array<i64: 256, 112>}, {pipeline_mode = #tpu.pipeline_mode<synchronous>, transform_indices = @transform_1, window_bounds = array<i64: 112, 64>}, {pipeline_mode = #tpu.pipeline_mode<synchronous>, transform_indices = @transform_2, window_bounds = array<i64: 2, 64>}, {pipeline_mode = #tpu.pipeline_mode<synchronous>, transform_indices = @transform_3, window_bounds = array<i64: 64, 64>}, {pipeline_mode = #tpu.pipeline_mode<synchronous>, transform_indices = @transform_4, window_bounds = array<i64: 64, 2>}, {pipeline_mode = #tpu.pipeline_mode<synchronous>, transform_indices = @transform_5, window_bounds = array<i64: 1, 2>}, {transform_indices = @transform_6, window_bounds = array<i64: 256, 2>}]} {
    %c0 = arith.constant 0 : index
    %c0_0 = arith.constant 0 : index
    %0 = vector.load %arg1[%c0, %c0_0] : memref<256x112xf32, #tpu.memory_space<vmem>>, vector<256x112xf32>
    %c0_1 = arith.constant 0 : index
    %c0_2 = arith.constant 0 : index
    %1 = vector.load %arg2[%c0_1, %c0_2] : memref<112x64xf32, #tpu.memory_space<vmem>>, vector<112x64xf32>
    %cst = arith.constant dense<0.000000e+00> : vector<256x64xf32>
    %2 = tpu.matmul %0, %1, %cst {dimension_numbers = #tpu.dot_dimension_numbers<[1], [0], [0], [1], [0, 0, 1, 1], [], []>} : vector<256x112xf32>, vector<112x64xf32>, vector<256x64xf32> -> vector<256x64xf32>
    %c0_3 = arith.constant 0 : index
    %c0_4 = arith.constant 0 : index
    %3 = vector.load %arg3[%c0_3, %c0_4] : memref<2x64xf32, #tpu.memory_space<vmem>>, vector<1x64xf32>
    %4 = vector.broadcast %3 : vector<1x64xf32> to vector<256x64xf32>
    %5 = arith.addf %2, %4 : vector<256x64xf32>
    %cst_5 = arith.constant 0.000000e+00 : f32
    %6 = vector.broadcast %cst_5 : f32 to vector<256x64xf32>
    %7 = arith.maximumf %5, %6 : vector<256x64xf32>
    %c0_6 = arith.constant 0 : index
    %c0_7 = arith.constant 0 : index
    %8 = vector.load %arg4[%c0_6, %c0_7] : memref<64x64xf32, #tpu.memory_space<vmem>>, vector<64x64xf32>
    %cst_8 = arith.constant dense<0.000000e+00> : vector<256x64xf32>
    %9 = tpu.matmul %7, %8, %cst_8 {dimension_numbers = #tpu.dot_dimension_numbers<[1], [0], [0], [1], [0, 0, 1, 1], [], []>} : vector<256x64xf32>, vector<64x64xf32>, vector<256x64xf32> -> vector<256x64xf32>
    %c1 = arith.constant 1 : index
    %c0_9 = arith.constant 0 : index
    %10 = vector.load %arg3[%c1, %c0_9] : memref<2x64xf32, #tpu.memory_space<vmem>>, vector<1x64xf32>
    %11 = vector.broadcast %10 : vector<1x64xf32> to vector<256x64xf32>
    %12 = arith.addf %9, %11 : vector<256x64xf32>
    %13 = tpu.iota {dimensions = array<i32: 1>} : vector<256x64xi32>
    %c32_i32 = arith.constant 32 : i32
    %14 = vector.broadcast %c32_i32 : i32 to vector<256x64xi32>
    %15 = arith.cmpi sge, %13, %14 : vector<256x64xi32>
    %c48_i32 = arith.constant 48 : i32
    %16 = vector.broadcast %c48_i32 : i32 to vector<256x64xi32>
    %17 = arith.cmpi slt, %13, %16 : vector<256x64xi32>
    %18 = arith.andi %15, %17 : vector<256x64xi1>
    %cst_10 = arith.constant 0.000000e+00 : f32
    %19 = vector.broadcast %cst_10 : f32 to vector<256x64xf32>
    %20 = arith.subf %19, %12 : vector<256x64xf32>
    %21 = math.exp %20 : vector<256x64xf32>
    %cst_11 = arith.constant 1.000000e+00 : f32
    %22 = vector.broadcast %cst_11 : f32 to vector<256x64xf32>
    %23 = arith.addf %22, %21 : vector<256x64xf32>
    %24 = tpu.reciprocal %23 {approx = true} : vector<256x64xf32> -> vector<256x64xf32>
    %cst_12 = arith.constant 0.000000e+00 : f32
    %25 = vector.broadcast %cst_12 : f32 to vector<256x64xf32>
    %26 = arith.maximumf %12, %25 : vector<256x64xf32>
    %27 = arith.select %18, %24, %26 : vector<256x64xi1>, vector<256x64xf32>
    %c0_13 = arith.constant 0 : index
    %c0_14 = arith.constant 0 : index
    %28 = vector.load %arg5[%c0_13, %c0_14] : memref<64x2xf32, #tpu.memory_space<vmem>>, vector<64x2xf32>
    %cst_15 = arith.constant dense<0.000000e+00> : vector<256x2xf32>
    %29 = tpu.matmul %27, %28, %cst_15 {dimension_numbers = #tpu.dot_dimension_numbers<[1], [0], [0], [1], [0, 0, 1, 1], [], []>} : vector<256x64xf32>, vector<64x2xf32>, vector<256x2xf32> -> vector<256x2xf32>
    %c0_16 = arith.constant 0 : index
    %c0_17 = arith.constant 0 : index
    %30 = vector.load %arg6[%c0_16, %c0_17] : memref<1x2xf32, #tpu.memory_space<vmem>>, vector<1x2xf32>
    %31 = vector.broadcast %30 : vector<1x2xf32> to vector<256x2xf32>
    %32 = arith.addf %29, %31 : vector<256x2xf32>
    %c0_18 = arith.constant 0 : index
    %c0_19 = arith.constant 0 : index
    %33 = vector.load %arg7[%c0_18, %c0_19] : memref<256x2xf32, #tpu.memory_space<vmem>>, vector<256x2xf32>
    tpu.vector_store %arg7[%c0_18, %c0_19], %32 {strides = array<i32>} : memref<256x2xf32, #tpu.memory_space<vmem>>, vector<256x2xf32>,
    return
  }
  func.func @transform_0(%arg0: i32) -> (i32, i32) {
    %c0_i32 = arith.constant 0 : i32
    %c0_i32_0 = arith.constant 0 : i32
    return %arg0, %c0_i32 : i32, i32
  }
  func.func @transform_1(%arg0: i32) -> (i32, i32) {
    %c0_i32 = arith.constant 0 : i32
    %c0_i32_0 = arith.constant 0 : i32
    %c0_i32_1 = arith.constant 0 : i32
    return %c0_i32, %c0_i32_0 : i32, i32
  }
  func.func @transform_2(%arg0: i32) -> (i32, i32) {
    %c0_i32 = arith.constant 0 : i32
    %c0_i32_0 = arith.constant 0 : i32
    %c0_i32_1 = arith.constant 0 : i32
    return %c0_i32, %c0_i32_0 : i32, i32
  }
  func.func @transform_3(%arg0: i32) -> (i32, i32) {
    %c0_i32 = arith.constant 0 : i32
    %c0_i32_0 = arith.constant 0 : i32
    %c0_i32_1 = arith.constant 0 : i32
    return %c0_i32, %c0_i32_0 : i32, i32
  }
  func.func @transform_4(%arg0: i32) -> (i32, i32) {
    %c0_i32 = arith.constant 0 : i32
    %c0_i32_0 = arith.constant 0 : i32
    %c0_i32_1 = arith.constant 0 : i32
    return %c0_i32, %c0_i32_0 : i32, i32
  }
  func.func @transform_5(%arg0: i32) -> (i32, i32) {
    %c0_i32 = arith.constant 0 : i32
    %c0_i32_0 = arith.constant 0 : i32
    %c0_i32_1 = arith.constant 0 : i32
    return %c0_i32, %c0_i32_0 : i32, i32
  }
  func.func @transform_6(%arg0: i32) -> (i32, i32) {
    %c0_i32 = arith.constant 0 : i32
    %c0_i32_0 = arith.constant 0 : i32
    return %arg0, %c0_i32 : i32, i32
  }
}

</mosaic_0001>

<llo_original>
// kernel: tpu_custom_call.1
$region0: #{tpu_custom_call.1}
  #allocation0 [shape = 'u32[]', space=smem, size = 0x4, offset = 0x4, fixed_abs, tag = 'smem constant byte address 0x4 - core index']
  #allocation1 [shape = 'u32[144,128]{1,0:T(1,128)}', space=vmem, size = 0x12000, scoped, tag = 'internal scratch']
  %s0 = inlined_call_operand.vmem [shape: f32[512,112], index: 0, kind: input, shape index: {}]
  %s1 = inlined_call_operand.vmem [shape: f32[112,64], index: 1, kind: input, shape index: {}]
  %s2 = inlined_call_operand.vmem [shape: f32[2,64], index: 2, kind: input, shape index: {}]
  %s3 = inlined_call_operand.vmem [shape: f32[64,64], index: 3, kind: input, shape index: {}]
  %s4 = inlined_call_operand.vmem [shape: f32[64,2], index: 4, kind: input, shape index: {}]
  %s5 = inlined_call_operand.vmem [shape: f32[1,2], index: 5, kind: input, shape index: {}]
  %s6 = inlined_call_operand.vmem [shape: f32[512,2], index: 6, kind: output, shape index: {}]
  %s7 = sld [smem:[#allocation0]]
  $region57: #{tpu_custom_call.1} parent=0
    _
  %s9 = ssub.s32 1, %s7
  %s10 = scalar_select 0, %s9, %s7
  loop: start=0, step=1, limit=4
  $region2: #{tpu_custom_call.1} parent=0 // loop_pre_header
    _
  $region3: #{tpu_custom_call.1} parent=0 // loop_header
    %s12 = sphi 0, %s16
    %p13 = scmp.ge.s32.totalorder %s12, 4
    %s22 = sphi 0, %s24
    %s25 = sphi 0, %s22
    %s26 = sphi 0, %s25
    %s42 = sphi 0, %s26
    %s46 = sphi 0, %s46
    %s48 = sphi 0, %s46
    %s49 = sphi 0, %s48
    %s63 = sphi 0, %s49
    %s67 = sphi 0, %s67
    %s69 = sphi 0, %s67
    %s70 = sphi 0, %s69
    %s84 = sphi 0, %s70
    %s88 = sphi 0, %s88
    %s90 = sphi 0, %s88
    %s91 = sphi 0, %s90
    %s105 = sphi 0, %s91
    %s109 = sphi 0, %s109
    %s111 = sphi 0, %s109
    %s112 = sphi 0, %s111
    %s126 = sphi 0, %s112
    %s130 = sphi 0, %s130
    %s132 = sphi 0, %s130
    %s133 = sphi 0, %s132
    %s147 = sphi 0, %s133
    %s153 = sphi 0, %s155
    %s156 = sphi 0, %s153
    %s157 = sphi 0, %s156
    %s173 = sphi 0, %s157
  $region4: #{tpu_custom_call.1} parent=0 // loop_header_branch
    %15 = sbr.rel (%p13) target = $region8
  $region5: #{tpu_custom_call.1} parent=0 // loop_body
    %s17 = ssub.s32 %s12, 1
    %s18 = ssub.s32 %s12, 2
    %s19 = sadd.s32 %s12, 1
    %s20 = ssub.s32 %s12, %s19
    %p21 = scmp.eq.s32.totalorder %s20, 0
    %s23 = sadd.s32 %s22, 1
    %s24 = scalar_select %p21, %s22, %s23
    %p27 = pneg %p21
    %p28 = scmp.eq.s32.totalorder %s12, 1
    %p29 = por %p27, %p28
    %p30 = scmp.ne.s32.totalorder %s22, %s25
    %p31 = scmp.eq.s32.totalorder %s12, 0
    %p32 = por %p30, %p31
    %p33 = scmp.ne.s32.totalorder %s22, %s25
    %p34 = scmp.eq.s32.totalorder %s17, 1
    %p35 = por %p33, %p34
    %p36 = scmp.ne.s32.totalorder %s25, %s26
    %p37 = scmp.eq.s32.totalorder %s17, 0
    %p38 = por %p36, %p37
    %p39 = scmp.ne.s32.totalorder %s25, %s26
    %p40 = scmp.eq.s32.totalorder %s18, 1
    %p41 = por %p39, %p40
    %p43 = scmp.ne.s32.totalorder %s26, %s42
    %p44 = scmp.eq.s32.totalorder %s18, 0
    %p45 = por %p43, %p44
    %s47 = sadd.s32 %s46, 1
    %p50 = scmp.eq.s32.totalorder %s12, 1
    %p51 = scmp.ne.s32.totalorder %s46, %s48
    %p52 = scmp.eq.s32.totalorder %s12, 0
    %p53 = por %p51, %p52
    %p54 = scmp.ne.s32.totalorder %s46, %s48
    %p55 = scmp.eq.s32.totalorder %s17, 1
    %p56 = por %p54, %p55
    %p57 = scmp.ne.s32.totalorder %s48, %s49
    %p58 = scmp.eq.s32.totalorder %s17, 0
    %p59 = por %p57, %p58
    %p60 = scmp.ne.s32.totalorder %s48, %s49
    %p61 = scmp.eq.s32.totalorder %s18, 1
    %p62 = por %p60, %p61
    %p64 = scmp.ne.s32.totalorder %s49, %s63
    %p65 = scmp.eq.s32.totalorder %s18, 0
    %p66 = por %p64, %p65
    %s68 = sadd.s32 %s67, 1
    %p71 = scmp.eq.s32.totalorder %s12, 1
    %p72 = scmp.ne.s32.totalorder %s67, %s69
    %p73 = scmp.eq.s32.totalorder %s12, 0
    %p74 = por %p72, %p73
    %p75 = scmp.ne.s32.totalorder %s67, %s69
    %p76 = scmp.eq.s32.totalorder %s17, 1
    %p77 = por %p75, %p76
    %p78 = scmp.ne.s32.totalorder %s69, %s70
    %p79 = scmp.eq.s32.totalorder %s17, 0
    %p80 = por %p78, %p79
    %p81 = scmp.ne.s32.totalorder %s69, %s70
    %p82 = scmp.eq.s32.totalorder %s18, 1
    %p83 = por %p81, %p82
    %p85 = scmp.ne.s32.totalorder %s70, %s84
    %p86 = scmp.eq.s32.totalorder %s18, 0
    %p87 = por %p85, %p86
    %s89 = sadd.s32 %s88, 1
    %p92 = scmp.eq.s32.totalorder %s12, 1
    %p93 = scmp.ne.s32.totalorder %s88, %s90
    %p94 = scmp.eq.s32.totalorder %s12, 0
    %p95 = por %p93, %p94
    %p96 = scmp.ne.s32.totalorder %s88, %s90
    %p97 = scmp.eq.s32.totalorder %s17, 1
    %p98 = por %p96, %p97
    %p99 = scmp.ne.s32.totalorder %s90, %s91
    %p100 = scmp.eq.s32.totalorder %s17, 0
    %p101 = por %p99, %p100
    %p102 = scmp.ne.s32.totalorder %s90, %s91
    %p103 = scmp.eq.s32.totalorder %s18, 1
    %p104 = por %p102, %p103
    %p106 = scmp.ne.s32.totalorder %s91, %s105
    %p107 = scmp.eq.s32.totalorder %s18, 0
    %p108 = por %p106, %p107
    %s110 = sadd.s32 %s109, 1
    %p113 = scmp.eq.s32.totalorder %s12, 1
    %p114 = scmp.ne.s32.totalorder %s109, %s111
    %p115 = scmp.eq.s32.totalorder %s12, 0
    %p116 = por %p114, %p115
    %p117 = scmp.ne.s32.totalorder %s109, %s111
    %p118 = scmp.eq.s32.totalorder %s17, 1
    %p119 = por %p117, %p118
    %p120 = scmp.ne.s32.totalorder %s111, %s112
    %p121 = scmp.eq.s32.totalorder %s17, 0
    %p122 = por %p120, %p121
    %p123 = scmp.ne.s32.totalorder %s111, %s112
    %p124 = scmp.eq.s32.totalorder %s18, 1
    %p125 = por %p123, %p124
    %p127 = scmp.ne.s32.totalorder %s112, %s126
    %p128 = scmp.eq.s32.totalorder %s18, 0
    %p129 = por %p127, %p128
    %s131 = sadd.s32 %s130, 1
    %p134 = scmp.eq.s32.totalorder %s12, 1
    %p135 = scmp.ne.s32.totalorder %s130, %s132
    %p136 = scmp.eq.s32.totalorder %s12, 0
    %p137 = por %p135, %p136
    %p138 = scmp.ne.s32.totalorder %s130, %s132
    %p139 = scmp.eq.s32.totalorder %s17, 1
    %p140 = por %p138, %p139
    %p141 = scmp.ne.s32.totalorder %s132, %s133
    %p142 = scmp.eq.s32.totalorder %s17, 0
    %p143 = por %p141, %p142
    %p144 = scmp.ne.s32.totalorder %s132, %s133
    %p145 = scmp.eq.s32.totalorder %s18, 1
    %p146 = por %p144, %p145
    %p148 = scmp.ne.s32.totalorder %s133, %s147
    %p149 = scmp.eq.s32.totalorder %s18, 0
    %p150 = por %p148, %p149
    %s151 = ssub.s32 %s12, %s19
    %p152 = scmp.eq.s32.totalorder %s151, 0
    %s154 = sadd.s32 %s153, 1
    %s155 = scalar_select %p152, %s153, %s154
    %p158 = pneg %p152
    %p159 = scmp.eq.s32.totalorder %s12, 1
    %p160 = por %p158, %p159
    %p161 = scmp.ne.s32.totalorder %s153, %s156
    %p162 = scmp.eq.s32.totalorder %s12, 0
    %p163 = por %p161, %p162
    %p164 = scmp.ne.s32.totalorder %s153, %s156
    %p165 = scmp.eq.s32.totalorder %s17, 1
    %p166 = por %p164, %p165
    %p167 = scmp.ne.s32.totalorder %s156, %s157
    %p168 = scmp.eq.s32.totalorder %s17, 0
    %p169 = por %p167, %p168
    %p170 = scmp.ne.s32.totalorder %s156, %s157
    %p171 = scmp.eq.s32.totalorder %s18, 1
    %p172 = por %p170, %p171
    %p174 = scmp.ne.s32.totalorder %s157, %s173
    %p175 = scmp.eq.s32.totalorder %s18, 0
    %p176 = por %p174, %p175
    %p177 = scmp.le.s32.totalorder 1, %s12
    %p178 = scmp.lt.s32.totalorder %s12, 3
    %p179 = pnand %p177, %p178
    %p180 = pneg %p179
    // Predicated region
    $region9: #{tpu_custom_call.1} parent=5 // pred_check
      _
    $region10: #{tpu_custom_call.1} parent=5 // pred_check_branch
      %182 = sbr.rel (%p179) target = $region12
    $region11: #{tpu_custom_call.1} parent=5 // pred_region
      %s183 = ssub.s32 %s12, 1
      // Predicated region
      $region13: #{tpu_custom_call.1} parent=11 // pred_check
        %p184 = pneg %p59
      $region14: #{tpu_custom_call.1} parent=11 // pred_check_branch
        %186 = sbr.rel (%p184) target = $region16
      $region15: #{tpu_custom_call.1} parent=11 // pred_region
        _
      $region16: #{tpu_custom_call.1} parent=11 // pred_fallthru
        _
      // Predicated region
      $region17: #{tpu_custom_call.1} parent=11 // pred_check
        %p187 = pneg %p80
      $region18: #{tpu_custom_call.1} parent=11 // pred_check_branch
        %189 = sbr.rel (%p187) target = $region20
      $region19: #{tpu_custom_call.1} parent=11 // pred_region
        _
      $region20: #{tpu_custom_call.1} parent=11 // pred_fallthru
        _
      // Predicated region
      $region21: #{tpu_custom_call.1} parent=11 // pred_check
        %p190 = pneg %p101
      $region22: #{tpu_custom_call.1} parent=11 // pred_check_branch
        %192 = sbr.rel (%p190) target = $region24
      $region23: #{tpu_custom_call.1} parent=11 // pred_region
        _
      $region24: #{tpu_custom_call.1} parent=11 // pred_fallthru
        _
      // Predicated region
      $region25: #{tpu_custom_call.1} parent=11 // pred_check
        %p193 = pneg %p122
      $region26: #{tpu_custom_call.1} parent=11 // pred_check_branch
        %195 = sbr.rel (%p193) target = $region28
      $region27: #{tpu_custom_call.1} parent=11 // pred_region
        _
      $region28: #{tpu_custom_call.1} parent=11 // pred_fallthru
        _
      // Predicated region
      $region29: #{tpu_custom_call.1} parent=11 // pred_check
        %p196 = pneg %p143
      $region30: #{tpu_custom_call.1} parent=11 // pred_check_branch
        %198 = sbr.rel (%p196) target = $region32
      $region31: #{tpu_custom_call.1} parent=11 // pred_region
        _
      $region32: #{tpu_custom_call.1} parent=11 // pred_fallthru
        _
    $region12: #{tpu_custom_call.1} parent=5 // pred_fallthru
      _
    %p199 = scmp.lt.s32.totalorder %s12, 2
    // Predicated region
    $region33: #{tpu_custom_call.1} parent=5 // pred_check
      %p200 = pneg %p199
    $region34: #{tpu_custom_call.1} parent=5 // pred_check_branch
      %202 = sbr.rel (%p200) target = $region36
    $region35: #{tpu_custom_call.1} parent=5 // pred_region
      // Predicated region
      $region37: #{tpu_custom_call.1} parent=35 // pred_check
        %p203 = pneg %p32
      $region38: #{tpu_custom_call.1} parent=35 // pred_check_branch
        %205 = sbr.rel (%p203) target = $region40
      $region39: #{tpu_custom_call.1} parent=35 // pred_region
        %s206 = smul.u32 32, %s12
        %p207 = scmp.lt.s32.totalorder %s206, 63
        %s208 = scalar_select %p207, %s206, 63
        %s209 = smul.addr %s208, 8
        %s210 = scalar_lea.vmem %s0, %s209
        %s211 = smul.u32 32, %s12
      $region40: #{tpu_custom_call.1} parent=35 // pred_fallthru
        _
    $region36: #{tpu_custom_call.1} parent=5 // pred_fallthru
      _
    %p212 = scmp.le.s32.totalorder 1, %s12
    %p213 = scmp.lt.s32.totalorder %s12, 3
    %p214 = pnand %p212, %p213
    %p215 = pneg %p214
    // Predicated region
    $region41: #{tpu_custom_call.1} parent=5 // pred_check
      _
    $region42: #{tpu_custom_call.1} parent=5 // pred_check_branch
      %217 = sbr.rel (%p214) target = $region44
    $region43: #{tpu_custom_call.1} parent=5 // pred_region
      %s218 = ssub.s32 %s12, 1
      %s219 = smul.u32 32, %s17
      %p220 = scmp.lt.s32.totalorder %s219, 63
      %s221 = scalar_select %p220, %s219, 63
      %s222 = smul.addr %s221, 8
      %s223 = scalar_lea.vmem %s0, %s222
      %p224 = pneg %p38
      %p225 = pneg %p35
      %p226 = pneg %p59
      %p227 = pneg %p56
      %p228 = pneg %p80
      %p229 = pneg %p77
      %p230 = pneg %p101
      %p231 = pneg %p98
      %p232 = pneg %p122
      %p233 = pneg %p119
      %p234 = pneg %p143
      %p235 = pneg %p140
      %p236 = pneg %p169
      %p237 = pneg %p166
      %s238 = smul.u32 32, %s17
      %p239 = scmp.lt.s32.totalorder %s238, 63
      %s240 = scalar_select %p239, %s238, 63
      %s241 = smul.addr %s240, 8
      %s242 = scalar_lea.vmem %s6, %s241
      %s243 = smul.u32 32, %s17
      %p244 = scmp.lt.s32.totalorder %s243, 63
      %s245 = scalar_select %p244, %s243, 63
      %s246 = smul.addr %s245, 8
      %s247 = scalar_lea.vmem %s0, %s246
      %s248 = smul.u32 32, %s17
      %s249 = smul.u32 32, %s17
      %p250 = scmp.lt.s32.totalorder %s249, 63
      %s251 = scalar_select %p250, %s249, 63
      %s252 = smul.addr %s251, 8
      %s253 = scalar_lea.vmem %s6, %s252
      %s254 = smul.u32 32, %s17
      %v255 = vld [vmem:[%s247] sm:$0xff]
      %v256 = vld [vmem:[%s247 + $0x8] sm:$0xff]
      %v257 = vld [vmem:[%s247 + $0x10] sm:$0xff]
      %v258 = vld [vmem:[%s247 + $0x18] sm:$0xff]
      %v259 = vld [vmem:[%s247 + $0x20] sm:$0xff]
      %v260 = vld [vmem:[%s247 + $0x28] sm:$0xff]
      %v261 = vld [vmem:[%s247 + $0x30] sm:$0xff]
      %v262 = vld [vmem:[%s247 + $0x38] sm:$0xff]
      %v263 = vld [vmem:[%s247 + $0x40] sm:$0xff]
      %v264 = vld [vmem:[%s247 + $0x48] sm:$0xff]
      %v265 = vld [vmem:[%s247 + $0x50] sm:$0xff]
      %v266 = vld [vmem:[%s247 + $0x58] sm:$0xff]
      %v267 = vld [vmem:[%s247 + $0x60] sm:$0xff]
      %v268 = vld [vmem:[%s247 + $0x68] sm:$0xff]
      %v269 = vld [vmem:[%s247 + $0x70] sm:$0xff]
      %v270 = vld [vmem:[%s247 + $0x78] sm:$0xff]
      %v271 = vld [vmem:[%s247 + $0x80] sm:$0xff]
      %v272 = vld [vmem:[%s247 + $0x88] sm:$0xff]
      %v273 = vld [vmem:[%s247 + $0x90] sm:$0xff]
      %v274 = vld [vmem:[%s247 + $0x98] sm:$0xff]
      %v275 = vld [vmem:[%s247 + $0xa0] sm:$0xff]
      %v276 = vld [vmem:[%s247 + $0xa8] sm:$0xff]
      %v277 = vld [vmem:[%s247 + $0xb0] sm:$0xff]
      %v278 = vld [vmem:[%s247 + $0xb8] sm:$0xff]
      %v279 = vld [vmem:[%s247 + $0xc0] sm:$0xff]
      %v280 = vld [vmem:[%s247 + $0xc8] sm:$0xff]
      %v281 = vld [vmem:[%s247 + $0xd0] sm:$0xff]
      %v282 = vld [vmem:[%s247 + $0xd8] sm:$0xff]
      %v283 = vld [vmem:[%s247 + $0xe0] sm:$0xff]
      %v284 = vld [vmem:[%s247 + $0xe8] sm:$0xff]
      %v285 = vld [vmem:[%s247 + $0xf0] sm:$0xff]
      %v286 = vld [vmem:[%s247 + $0xf8] sm:$0xff]
      %v287 = vld [vmem:[%s1] sm:$0xff]
      %v288 = vld [vmem:[%s1 + $0x8] sm:$0xff]
      %v289 = vld [vmem:[%s1 + $0x10] sm:$0xff]
      %v290 = vld [vmem:[%s1 + $0x18] sm:$0xff]
      %v291 = vld [vmem:[%s1 + $0x20] sm:$0xff]
      %v292 = vld [vmem:[%s1 + $0x28] sm:$0xff]
      %v293 = vld [vmem:[%s1 + $0x30] sm:$0xff]
      %v294 = vld [vmem:[%s1 + $0x38] sm:$0xff]
      %v295 = vld [vmem:[%s1 + $0x40] sm:$0xff]
      %v296 = vld [vmem:[%s1 + $0x48] sm:$0xff]
      %v297 = vld [vmem:[%s1 + $0x50] sm:$0xff]
      %v298 = vld [vmem:[%s1 + $0x58] sm:$0xff]
      %v299 = vld [vmem:[%s1 + $0x60] sm:$0xff]
      %v300 = vld [vmem:[%s1 + $0x68] sm:$0xff]
      %v301 = vld [vmem:[%s2] sm:$0x1]
      %v302 = vlaneseq
      %v303 = vshrl.u32 %v302, 7
      %v304 = vsub.s32 0, %v303
      %v305 = vrot.slane %v301, %v304
      %vm306 = vcmask 916480
      %v308 = vsel %vm306, %v255, 0
      %v311 = vsel %vm306, %v256, 0
      %v314 = vsel %vm306, %v257, 0
      %v317 = vsel %vm306, %v258, 0
      %v320 = vsel %vm306, %v259, 0
      %v323 = vsel %vm306, %v260, 0
      %v326 = vsel %vm306, %v261, 0
      %v329 = vsel %vm306, %v262, 0
      %v332 = vsel %vm306, %v263, 0
      %v335 = vsel %vm306, %v264, 0
      %v338 = vsel %vm306, %v265, 0
      %v341 = vsel %vm306, %v266, 0
      %v344 = vsel %vm306, %v267, 0
      %v347 = vsel %vm306, %v268, 0
      %v350 = vsel %vm306, %v269, 0
      %v353 = vsel %vm306, %v270, 0
      %v356 = vsel %vm306, %v271, 0
      %v359 = vsel %vm306, %v272, 0
      %v362 = vsel %vm306, %v273, 0
      %v365 = vsel %vm306, %v274, 0
      %v368 = vsel %vm306, %v275, 0
      %v371 = vsel %vm306, %v276, 0
      %v374 = vsel %vm306, %v277, 0
      %v377 = vsel %vm306, %v278, 0
      %v380 = vsel %vm306, %v279, 0
      %v383 = vsel %vm306, %v280, 0
      %v386 = vsel %vm306, %v281, 0
      %v389 = vsel %vm306, %v282, 0
      %v392 = vsel %vm306, %v283, 0
      %v395 = vsel %vm306, %v284, 0
      %v398 = vsel %vm306, %v285, 0
      %v401 = vsel %vm306, %v286, 0
      %403 = vmatprep.subr.mxu0 0.0
      %404 = vmatpush1.msra.mxu0 %v287
      %405 = vmatprep.subr.mxu0 0.0
      %406 = vmatpush1.msra.mxu0 %v288
      %407 = vmatprep.subr.mxu0 0.0
      %408 = vmatpush1.msra.mxu0 %v289
      %409 = vmatprep.subr.mxu0 0.0
      %410 = vmatpush1.msra.mxu0 %v290
      %411 = vmatprep.subr.mxu0 0.0
      %412 = vmatpush1.msra.mxu0 %v291
      %413 = vmatprep.subr.mxu0 0.0
      %414 = vmatpush1.msra.mxu0 %v292
      %415 = vmatprep.subr.mxu0 0.0
      %416 = vmatpush1.msra.mxu0 %v293
      %417 = vmatprep.subr.mxu0 0.0
      %418 = vmatpush1.msra.mxu0 %v294
      %419 = vmatprep.subr.mxu0 0.0
      %420 = vmatpush1.msra.mxu0 %v295
      %421 = vmatprep.subr.mxu0 0.0
      %422 = vmatpush1.msra.mxu0 %v296
      %423 = vmatprep.subr.mxu0 0.0
      %424 = vmatpush1.msra.mxu0 %v297
      %425 = vmatprep.subr.mxu0 0.0
      %426 = vmatpush1.msra.mxu0 %v298
      %427 = vmatprep.subr.mxu0 0.0
      %428 = vmatpush1.msra.mxu0 %v299
      %429 = vmatprep.subr.mxu0 0.0
      %430 = vmatpush1.msra.mxu0 %v300
      %431 = vmatprep.subr.mxu0 0.0
      %432 = vmatpush1.msra.mxu0 0.0
      %433 = vmatprep.subr.mxu0 0.0
      %434 = vmatpush1.msra.mxu0 0.0
      %435 = vmatprep.subr.mxu0 0.0
      %436 = vmatpush1.msra.mxu0 0.0
      %437 = vmatprep.subr.mxu0 0.0
      %438 = vmatpush1.msra.mxu0 0.0
      %439 = vmatprep.subr.mxu0 0.0
      %440 = vmatpush1.msra.mxu0 0.0
      %441 = vmatprep.subr.mxu0 0.0
      %442 = vmatpush1.msra.mxu0 0.0
      %443 = vmatprep.subr.mxu0 0.0
      %444 = vmatpush1.msra.mxu0 0.0
      %445 = vmatprep.subr.mxu0 0.0
      %446 = vmatpush1.msra.mxu0 0.0
      %447 = vmatprep.subr.mxu0 0.0
      %448 = vmatpush1.msra.mxu0 0.0
      %449 = vmatprep.subr.mxu0 0.0
      %450 = vmatpush1.msra.mxu0 0.0
      %451 = vmatprep.subr.mxu0 0.0
      %452 = vmatpush1.msra.mxu0 0.0
      %453 = vmatprep.subr.mxu0 0.0
      %454 = vmatpush1.msra.mxu0 0.0
      %455 = vmatprep.subr.mxu0 0.0
      %456 = vmatpush1.msra.mxu0 0.0
      %457 = vmatprep.subr.mxu0 0.0
      %458 = vmatpush1.msra.mxu0 0.0
      %459 = vmatprep.subr.mxu0 0.0
      %460 = vmatpush1.msra.mxu0 0.0
      %461 = vmatprep.subr.mxu0 0.0
      %462 = vmatpush1.msra.mxu0 0.0
      %463 = vmatprep.subr.mxu0 0.0
      %464 = vmatpush1.msra.mxu0 0.0
      %465 = vmatprep.subr.mxu0 0.0
      %466 = vmatpush1.msra.mxu0 0.0
      %467 = vmatprep.mubr.f32.mxu0 0.0
      %468 = vmatmul.mubr.f32.gmra.mrb[0].mxu0 %v308
      %v469 = vpop.f32.mrb[0].mxu0
      %v470 = vadd.f32 %v305, %v469
      %v471 = vpop.f32.mrb[0].mxu0
      %472 = vmatprep.mubr.f32.mxu0 0.0
      %473 = vmatmul.mubr.f32.gmra.mrb[0].mxu0 %v311
      %v474 = vpop.f32.mrb[0].mxu0
      %v475 = vadd.f32 %v305, %v474
      %v476 = vpop.f32.mrb[0].mxu0
      %477 = vmatprep.mubr.f32.mxu0 0.0
      %478 = vmatmul.mubr.f32.gmra.mrb[0].mxu0 %v314
      %v479 = vpop.f32.mrb[0].mxu0
      %v480 = vadd.f32 %v305, %v479
      %v481 = vpop.f32.mrb[0].mxu0
      %482 = vmatprep.mubr.f32.mxu0 0.0
      %483 = vmatmul.mubr.f32.gmra.mrb[0].mxu0 %v317
      %v484 = vpop.f32.mrb[0].mxu0
      %v485 = vadd.f32 %v305, %v484
      %v486 = vpop.f32.mrb[0].mxu0
      %487 = vmatprep.mubr.f32.mxu0 0.0
      %488 = vmatmul.mubr.f32.gmra.mrb[0].mxu0 %v320
      %v489 = vpop.f32.mrb[0].mxu0
      %v490 = vadd.f32 %v305, %v489
      %v491 = vpop.f32.mrb[0].mxu0
      %492 = vmatprep.mubr.f32.mxu0 0.0
      %493 = vmatmul.mubr.f32.gmra.mrb[0].mxu0 %v323
      %v494 = vpop.f32.mrb[0].mxu0
      %v495 = vadd.f32 %v305, %v494
      %v496 = vpop.f32.mrb[0].mxu0
      %497 = vmatprep.mubr.f32.mxu0 0.0
      %498 = vmatmul.mubr.f32.gmra.mrb[0].mxu0 %v326
      %v499 = vpop.f32.mrb[0].mxu0
      %v500 = vadd.f32 %v305, %v499
      %v501 = vpop.f32.mrb[0].mxu0
      %502 = vmatprep.mubr.f32.mxu0 0.0
      %503 = vmatmul.mubr.f32.gmra.mrb[0].mxu0 %v329
      %v504 = vpop.f32.mrb[0].mxu0
      %v505 = vadd.f32 %v305, %v504
      %v506 = vpop.f32.mrb[0].mxu0
      %507 = vmatprep.mubr.f32.mxu0 0.0
      %508 = vmatmul.mubr.f32.gmra.mrb[0].mxu0 %v332
      %v509 = vpop.f32.mrb[0].mxu0
      %v510 = vadd.f32 %v305, %v509
      %v511 = vpop.f32.mrb[0].mxu0
      %512 = vmatprep.mubr.f32.mxu0 0.0
      %513 = vmatmul.mubr.f32.gmra.mrb[0].mxu0 %v335
      %v514 = vpop.f32.mrb[0].mxu0
      %v515 = vadd.f32 %v305, %v514
      %v516 = vpop.f32.mrb[0].mxu0
      %517 = vmatprep.mubr.f32.mxu0 0.0
      %518 = vmatmul.mubr.f32.gmra.mrb[0].mxu0 %v338
      %v519 = vpop.f32.mrb[0].mxu0
      %v520 = vadd.f32 %v305, %v519
      %v521 = vpop.f32.mrb[0].mxu0
      %522 = vmatprep.mubr.f32.mxu0 0.0
      %523 = vmatmul.mubr.f32.gmra.mrb[0].mxu0 %v341
      %v524 = vpop.f32.mrb[0].mxu0
      %v525 = vadd.f32 %v305, %v524
      %v526 = vpop.f32.mrb[0].mxu0
      %527 = vmatprep.mubr.f32.mxu0 0.0
      %528 = vmatmul.mubr.f32.gmra.mrb[0].mxu0 %v344
      %v529 = vpop.f32.mrb[0].mxu0
      %v530 = vadd.f32 %v305, %v529
      %v531 = vpop.f32.mrb[0].mxu0
      %532 = vmatprep.mubr.f32.mxu0 0.0
      %533 = vmatmul.mubr.f32.gmra.mrb[0].mxu0 %v347
      %v534 = vpop.f32.mrb[0].mxu0
      %v535 = vadd.f32 %v305, %v534
      %v536 = vpop.f32.mrb[0].mxu0
      %537 = vmatprep.mubr.f32.mxu0 0.0
      %538 = vmatmul.mubr.f32.gmra.mrb[0].mxu0 %v350
      %v539 = vpop.f32.mrb[0].mxu0
      %v540 = vadd.f32 %v305, %v539
      %v541 = vpop.f32.mrb[0].mxu0
      %542 = vmatprep.mubr.f32.mxu0 0.0
      %543 = vmatmul.mubr.f32.gmra.mrb[0].mxu0 %v353
      %v544 = vpop.f32.mrb[0].mxu0
      %v545 = vadd.f32 %v305, %v544
      %v546 = vpop.f32.mrb[0].mxu0
      %547 = vmatprep.mubr.f32.mxu0 0.0
      %548 = vmatmul.mubr.f32.gmra.mrb[0].mxu0 %v356
      %v549 = vpop.f32.mrb[0].mxu0
      %v550 = vadd.f32 %v305, %v549
      %v551 = vpop.f32.mrb[0].mxu0
      %552 = vmatprep.mubr.f32.mxu0 0.0
      %553 = vmatmul.mubr.f32.gmra.mrb[0].mxu0 %v359
      %v554 = vpop.f32.mrb[0].mxu0
      %v555 = vadd.f32 %v305, %v554
      %v556 = vpop.f32.mrb[0].mxu0
      %557 = vmatprep.mubr.f32.mxu0 0.0
      %558 = vmatmul.mubr.f32.gmra.mrb[0].mxu0 %v362
      %v559 = vpop.f32.mrb[0].mxu0
      %v560 = vadd.f32 %v305, %v559
      %v561 = vpop.f32.mrb[0].mxu0
      %562 = vmatprep.mubr.f32.mxu0 0.0
      %563 = vmatmul.mubr.f32.gmra.mrb[0].mxu0 %v365
      %v564 = vpop.f32.mrb[0].mxu0
      %v565 = vadd.f32 %v305, %v564
      %v566 = vpop.f32.mrb[0].mxu0
      %567 = vmatprep.mubr.f32.mxu0 0.0
      %568 = vmatmul.mubr.f32.gmra.mrb[0].mxu0 %v368
      %v569 = vpop.f32.mrb[0].mxu0
      %v570 = vadd.f32 %v305, %v569
      %v571 = vpop.f32.mrb[0].mxu0
      %572 = vmatprep.mubr.f32.mxu0 0.0
      %573 = vmatmul.mubr.f32.gmra.mrb[0].mxu0 %v371
      %v574 = vpop.f32.mrb[0].mxu0
      %v575 = vadd.f32 %v305, %v574
      %v576 = vpop.f32.mrb[0].mxu0
      %577 = vmatprep.mubr.f32.mxu0 0.0
      %578 = vmatmul.mubr.f32.gmra.mrb[0].mxu0 %v374
      %v579 = vpop.f32.mrb[0].mxu0
      %v580 = vadd.f32 %v305, %v579
      %v581 = vpop.f32.mrb[0].mxu0
      %582 = vmatprep.mubr.f32.mxu0 0.0
      %583 = vmatmul.mubr.f32.gmra.mrb[0].mxu0 %v377
      %v584 = vpop.f32.mrb[0].mxu0
      %v585 = vadd.f32 %v305, %v584
      %v586 = vpop.f32.mrb[0].mxu0
      %587 = vmatprep.mubr.f32.mxu0 0.0
      %588 = vmatmul.mubr.f32.gmra.mrb[0].mxu0 %v380
      %v589 = vpop.f32.mrb[0].mxu0
      %v590 = vadd.f32 %v305, %v589
      %v591 = vpop.f32.mrb[0].mxu0
      %592 = vmatprep.mubr.f32.mxu0 0.0
      %593 = vmatmul.mubr.f32.gmra.mrb[0].mxu0 %v383
      %v594 = vpop.f32.mrb[0].mxu0
      %v595 = vadd.f32 %v305, %v594
      %v596 = vpop.f32.mrb[0].mxu0
      %597 = vmatprep.mubr.f32.mxu0 0.0
      %598 = vmatmul.mubr.f32.gmra.mrb[0].mxu0 %v386
      %v599 = vpop.f32.mrb[0].mxu0
      %v600 = vadd.f32 %v305, %v599
      %v601 = vpop.f32.mrb[0].mxu0
      %602 = vmatprep.mubr.f32.mxu0 0.0
      %603 = vmatmul.mubr.f32.gmra.mrb[0].mxu0 %v389
      %v604 = vpop.f32.mrb[0].mxu0
      %v605 = vadd.f32 %v305, %v604
      %v606 = vpop.f32.mrb[0].mxu0
      %607 = vmatprep.mubr.f32.mxu0 0.0
      %608 = vmatmul.mubr.f32.gmra.mrb[0].mxu0 %v392
      %v609 = vpop.f32.mrb[0].mxu0
      %v610 = vadd.f32 %v305, %v609
      %v611 = vpop.f32.mrb[0].mxu0
      %612 = vmatprep.mubr.f32.mxu0 0.0
      %613 = vmatmul.mubr.f32.gmra.mrb[0].mxu0 %v395
      %v614 = vpop.f32.mrb[0].mxu0
      %v615 = vadd.f32 %v305, %v614
      %v616 = vpop.f32.mrb[0].mxu0
      %617 = vmatprep.mubr.f32.mxu0 0.0
      %618 = vmatmul.mubr.f32.gmra.mrb[0].mxu0 %v398
      %v619 = vpop.f32.mrb[0].mxu0
      %v620 = vadd.f32 %v305, %v619
      %v621 = vpop.f32.mrb[0].mxu0
      %622 = vmatprep.mubr.f32.mxu0 0.0
      %623 = vmatmul.mubr.f32.gmra.mrb[0].mxu0 %v401
      %v624 = vpop.f32.mrb[0].mxu0
      %v625 = vadd.f32 %v305, %v624
      %v626 = vpop.f32.mrb[0].mxu0
      %627 = vdwg.mxu0
      %v628 = vmax.f32 %v470, 0.0
      %v629 = vmax.f32 %v475, 0.0
      %v630 = vmax.f32 %v480, 0.0
      %v631 = vmax.f32 %v485, 0.0
      %v632 = vmax.f32 %v490, 0.0
      %v633 = vmax.f32 %v495, 0.0
      %v634 = vmax.f32 %v500, 0.0
      %v635 = vmax.f32 %v505, 0.0
      %v636 = vmax.f32 %v510, 0.0
      %v637 = vmax.f32 %v515, 0.0
      %v638 = vmax.f32 %v520, 0.0
      %v639 = vmax.f32 %v525, 0.0
      %v640 = vmax.f32 %v530, 0.0
      %v641 = vmax.f32 %v535, 0.0
      %v642 = vmax.f32 %v540, 0.0
      %v643 = vmax.f32 %v545, 0.0
      %v644 = vmax.f32 %v550, 0.0
      %v645 = vmax.f32 %v555, 0.0
      %v646 = vmax.f32 %v560, 0.0
      %v647 = vmax.f32 %v565, 0.0
      %v648 = vmax.f32 %v570, 0.0
      %v649 = vmax.f32 %v575, 0.0
      %v650 = vmax.f32 %v580, 0.0
      %v651 = vmax.f32 %v585, 0.0
      %v652 = vmax.f32 %v590, 0.0
      %v653 = vmax.f32 %v595, 0.0
      %v654 = vmax.f32 %v600, 0.0
      %v655 = vmax.f32 %v605, 0.0
      %v656 = vmax.f32 %v610, 0.0
      %v657 = vmax.f32 %v615, 0.0
      %v658 = vmax.f32 %v620, 0.0
      %v659 = vmax.f32 %v625, 0.0
      %v660 = vld [vmem:[%s3] sm:$0xff]
      %v661 = vld [vmem:[%s3 + $0x8] sm:$0xff]
      %v662 = vld [vmem:[%s3 + $0x10] sm:$0xff]
      %v663 = vld [vmem:[%s3 + $0x18] sm:$0xff]
      %v664 = vld [vmem:[%s3 + $0x20] sm:$0xff]
      %v665 = vld [vmem:[%s3 + $0x28] sm:$0xff]
      %v666 = vld [vmem:[%s3 + $0x30] sm:$0xff]
      %v667 = vld [vmem:[%s3 + $0x38] sm:$0xff]
      %v668 = vld [vmem:[%s2 + $0x1] sm:$0x1]
      %v669 = vlaneseq
      %v670 = vshrl.u32 %v669, 7
      %v671 = vsub.s32 0, %v670
      %v672 = vrot.slane %v668, %v671
      %vm673 = vcmask 523264
      %v675 = vsel %vm673, %v628, 0
      %v678 = vsel %vm673, %v629, 0
      %v681 = vsel %vm673, %v630, 0
      %v684 = vsel %vm673, %v631, 0
      %v687 = vsel %vm673, %v632, 0
      %v690 = vsel %vm673, %v633, 0
      %v693 = vsel %vm673, %v634, 0
      %v696 = vsel %vm673, %v635, 0
      %v699 = vsel %vm673, %v636, 0
      %v702 = vsel %vm673, %v637, 0
      %v705 = vsel %vm673, %v638, 0
      %v708 = vsel %vm673, %v639, 0
      %v711 = vsel %vm673, %v640, 0
      %v714 = vsel %vm673, %v641, 0
      %v717 = vsel %vm673, %v642, 0
      %v720 = vsel %vm673, %v643, 0
      %v723 = vsel %vm673, %v644, 0
      %v726 = vsel %vm673, %v645, 0
      %v729 = vsel %vm673, %v646, 0
      %v732 = vsel %vm673, %v647, 0
      %v735 = vsel %vm673, %v648, 0
      %v738 = vsel %vm673, %v649, 0
      %v741 = vsel %vm673, %v650, 0
      %v744 = vsel %vm673, %v651, 0
      %v747 = vsel %vm673, %v652, 0
      %v750 = vsel %vm673, %v653, 0
      %v753 = vsel %vm673, %v654, 0
      %v756 = vsel %vm673, %v655, 0
      %v759 = vsel %vm673, %v656, 0
      %v762 = vsel %vm673, %v657, 0
      %v765 = vsel %vm673, %v658, 0
      %v768 = vsel %vm673, %v659, 0
      %770 = vmatprep.subr.mxu0 0.0
      %771 = vmatpush1.msra.mxu0 %v660
      %772 = vmatprep.subr.mxu0 0.0
      %773 = vmatpush1.msra.mxu0 %v661
      %774 = vmatprep.subr.mxu0 0.0
      %775 = vmatpush1.msra.mxu0 %v662
      %776 = vmatprep.subr.mxu0 0.0
      %777 = vmatpush1.msra.mxu0 %v663
      %778 = vmatprep.subr.mxu0 0.0
      %779 = vmatpush1.msra.mxu0 %v664
      %780 = vmatprep.subr.mxu0 0.0
      %781 = vmatpush1.msra.mxu0 %v665
      %782 = vmatprep.subr.mxu0 0.0
      %783 = vmatpush1.msra.mxu0 %v666
      %784 = vmatprep.subr.mxu0 0.0
      %785 = vmatpush1.msra.mxu0 %v667
      %786 = vmatprep.subr.mxu0 0.0
      %787 = vmatpush1.msra.mxu0 0.0
      %788 = vmatprep.subr.mxu0 0.0
      %789 = vmatpush1.msra.mxu0 0.0
      %790 = vmatprep.subr.mxu0 0.0
      %791 = vmatpush1.msra.mxu0 0.0
      %792 = vmatprep.subr.mxu0 0.0
      %793 = vmatpush1.msra.mxu0 0.0
      %794 = vmatprep.subr.mxu0 0.0
      %795 = vmatpush1.msra.mxu0 0.0
      %796 = vmatprep.subr.mxu0 0.0
      %797 = vmatpush1.msra.mxu0 0.0
      %798 = vmatprep.subr.mxu0 0.0
      %799 = vmatpush1.msra.mxu0 0.0
      %800 = vmatprep.subr.mxu0 0.0
      %801 = vmatpush1.msra.mxu0 0.0
      %802 = vmatprep.subr.mxu0 0.0
      %803 = vmatpush1.msra.mxu0 0.0
      %804 = vmatprep.subr.mxu0 0.0
      %805 = vmatpush1.msra.mxu0 0.0
      %806 = vmatprep.subr.mxu0 0.0
      %807 = vmatpush1.msra.mxu0 0.0
      %808 = vmatprep.subr.mxu0 0.0
      %809 = vmatpush1.msra.mxu0 0.0
      %810 = vmatprep.subr.mxu0 0.0
      %811 = vmatpush1.msra.mxu0 0.0
      %812 = vmatprep.subr.mxu0 0.0
      %813 = vmatpush1.msra.mxu0 0.0
      %814 = vmatprep.subr.mxu0 0.0
      %815 = vmatpush1.msra.mxu0 0.0
      %816 = vmatprep.subr.mxu0 0.0
      %817 = vmatpush1.msra.mxu0 0.0
      %818 = vmatprep.subr.mxu0 0.0
      %819 = vmatpush1.msra.mxu0 0.0
      %820 = vmatprep.subr.mxu0 0.0
      %821 = vmatpush1.msra.mxu0 0.0
      %822 = vmatprep.subr.mxu0 0.0
      %823 = vmatpush1.msra.mxu0 0.0
      %824 = vmatprep.subr.mxu0 0.0
      %825 = vmatpush1.msra.mxu0 0.0
      %826 = vmatprep.subr.mxu0 0.0
      %827 = vmatpush1.msra.mxu0 0.0
      %828 = vmatprep.subr.mxu0 0.0
      %829 = vmatpush1.msra.mxu0 0.0
      %830 = vmatprep.subr.mxu0 0.0
      %831 = vmatpush1.msra.mxu0 0.0
      %832 = vmatprep.subr.mxu0 0.0
      %833 = vmatpush1.msra.mxu0 0.0
      %834 = vmatprep.mubr.f32.mxu0 0.0
      %835 = vmatmul.mubr.f32.gmra.mrb[0].mxu0 %v675
      %v836 = vpop.f32.mrb[0].mxu0
      %v837 = vadd.f32 %v672, %v836
      %v838 = vpop.f32.mrb[0].mxu0
      %839 = vmatprep.mubr.f32.mxu0 0.0
      %840 = vmatmul.mubr.f32.gmra.mrb[0].mxu0 %v678
      %v841 = vpop.f32.mrb[0].mxu0
      %v842 = vadd.f32 %v672, %v841
      %v843 = vpop.f32.mrb[0].mxu0
      %844 = vmatprep.mubr.f32.mxu0 0.0
      %845 = vmatmul.mubr.f32.gmra.mrb[0].mxu0 %v681
      %v846 = vpop.f32.mrb[0].mxu0
      %v847 = vadd.f32 %v672, %v846
      %v848 = vpop.f32.mrb[0].mxu0
      %849 = vmatprep.mubr.f32.mxu0 0.0
      %850 = vmatmul.mubr.f32.gmra.mrb[0].mxu0 %v684
      %v851 = vpop.f32.mrb[0].mxu0
      %v852 = vadd.f32 %v672, %v851
      %v853 = vpop.f32.mrb[0].mxu0
      %854 = vmatprep.mubr.f32.mxu0 0.0
      %855 = vmatmul.mubr.f32.gmra.mrb[0].mxu0 %v687
      %v856 = vpop.f32.mrb[0].mxu0
      %v857 = vadd.f32 %v672, %v856
      %v858 = vpop.f32.mrb[0].mxu0
      %859 = vmatprep.mubr.f32.mxu0 0.0
      %860 = vmatmul.mubr.f32.gmra.mrb[0].mxu0 %v690
      %v861 = vpop.f32.mrb[0].mxu0
      %v862 = vadd.f32 %v672, %v861
      %v863 = vpop.f32.mrb[0].mxu0
      %864 = vmatprep.mubr.f32.mxu0 0.0
      %865 = vmatmul.mubr.f32.gmra.mrb[0].mxu0 %v693
      %v866 = vpop.f32.mrb[0].mxu0
      %v867 = vadd.f32 %v672, %v866
      %v868 = vpop.f32.mrb[0].mxu0
      %869 = vmatprep.mubr.f32.mxu0 0.0
      %870 = vmatmul.mubr.f32.gmra.mrb[0].mxu0 %v696
      %v871 = vpop.f32.mrb[0].mxu0
      %v872 = vadd.f32 %v672, %v871
      %v873 = vpop.f32.mrb[0].mxu0
      %874 = vmatprep.mubr.f32.mxu0 0.0
      %875 = vmatmul.mubr.f32.gmra.mrb[0].mxu0 %v699
      %v876 = vpop.f32.mrb[0].mxu0
      %v877 = vadd.f32 %v672, %v876
      %v878 = vpop.f32.mrb[0].mxu0
      %879 = vmatprep.mubr.f32.mxu0 0.0
      %880 = vmatmul.mubr.f32.gmra.mrb[0].mxu0 %v702
      %v881 = vpop.f32.mrb[0].mxu0
      %v882 = vadd.f32 %v672, %v881
      %v883 = vpop.f32.mrb[0].mxu0
      %884 = vmatprep.mubr.f32.mxu0 0.0
      %885 = vmatmul.mubr.f32.gmra.mrb[0].mxu0 %v705
      %v886 = vpop.f32.mrb[0].mxu0
      %v887 = vadd.f32 %v672, %v886
      %v888 = vpop.f32.mrb[0].mxu0
      %889 = vmatprep.mubr.f32.mxu0 0.0
      %890 = vmatmul.mubr.f32.gmra.mrb[0].mxu0 %v708
      %v891 = vpop.f32.mrb[0].mxu0
      %v892 = vadd.f32 %v672, %v891
      %v893 = vpop.f32.mrb[0].mxu0
      %894 = vmatprep.mubr.f32.mxu0 0.0
      %895 = vmatmul.mubr.f32.gmra.mrb[0].mxu0 %v711
      %v896 = vpop.f32.mrb[0].mxu0
      %v897 = vadd.f32 %v672, %v896
      %v898 = vpop.f32.mrb[0].mxu0
      %899 = vmatprep.mubr.f32.mxu0 0.0
      %900 = vmatmul.mubr.f32.gmra.mrb[0].mxu0 %v714
      %v901 = vpop.f32.mrb[0].mxu0
      %v902 = vadd.f32 %v672, %v901
      %v903 = vpop.f32.mrb[0].mxu0
      %904 = vmatprep.mubr.f32.mxu0 0.0
      %905 = vmatmul.mubr.f32.gmra.mrb[0].mxu0 %v717
      %v906 = vpop.f32.mrb[0].mxu0
      %v907 = vadd.f32 %v672, %v906
      %v908 = vpop.f32.mrb[0].mxu0
      %909 = vmatprep.mubr.f32.mxu0 0.0
      %910 = vmatmul.mubr.f32.gmra.mrb[0].mxu0 %v720
      %v911 = vpop.f32.mrb[0].mxu0
      %v912 = vadd.f32 %v672, %v911
      %v913 = vpop.f32.mrb[0].mxu0
      %914 = vmatprep.mubr.f32.mxu0 0.0
      %915 = vmatmul.mubr.f32.gmra.mrb[0].mxu0 %v723
      %v916 = vpop.f32.mrb[0].mxu0
      %v917 = vadd.f32 %v672, %v916
      %v918 = vpop.f32.mrb[0].mxu0
      %919 = vmatprep.mubr.f32.mxu0 0.0
      %920 = vmatmul.mubr.f32.gmra.mrb[0].mxu0 %v726
      %v921 = vpop.f32.mrb[0].mxu0
      %v922 = vadd.f32 %v672, %v921
      %v923 = vpop.f32.mrb[0].mxu0
      %924 = vmatprep.mubr.f32.mxu0 0.0
      %925 = vmatmul.mubr.f32.gmra.mrb[0].mxu0 %v729
      %v926 = vpop.f32.mrb[0].mxu0
      %v927 = vadd.f32 %v672, %v926
      %v928 = vpop.f32.mrb[0].mxu0
      %929 = vmatprep.mubr.f32.mxu0 0.0
      %930 = vmatmul.mubr.f32.gmra.mrb[0].mxu0 %v732
      %v931 = vpop.f32.mrb[0].mxu0
      %v932 = vadd.f32 %v672, %v931
      %v933 = vpop.f32.mrb[0].mxu0
      %934 = vmatprep.mubr.f32.mxu0 0.0
      %935 = vmatmul.mubr.f32.gmra.mrb[0].mxu0 %v735
      %v936 = vpop.f32.mrb[0].mxu0
      %v937 = vadd.f32 %v672, %v936
      %v938 = vpop.f32.mrb[0].mxu0
      %939 = vmatprep.mubr.f32.mxu0 0.0
      %940 = vmatmul.mubr.f32.gmra.mrb[0].mxu0 %v738
      %v941 = vpop.f32.mrb[0].mxu0
      %v942 = vadd.f32 %v672, %v941
      %v943 = vpop.f32.mrb[0].mxu0
      %944 = vmatprep.mubr.f32.mxu0 0.0
      %945 = vmatmul.mubr.f32.gmra.mrb[0].mxu0 %v741
      %v946 = vpop.f32.mrb[0].mxu0
      %v947 = vadd.f32 %v672, %v946
      %v948 = vpop.f32.mrb[0].mxu0
      %949 = vmatprep.mubr.f32.mxu0 0.0
      %950 = vmatmul.mubr.f32.gmra.mrb[0].mxu0 %v744
      %v951 = vpop.f32.mrb[0].mxu0
      %v952 = vadd.f32 %v672, %v951
      %v953 = vpop.f32.mrb[0].mxu0
      %954 = vmatprep.mubr.f32.mxu0 0.0
      %955 = vmatmul.mubr.f32.gmra.mrb[0].mxu0 %v747
      %v956 = vpop.f32.mrb[0].mxu0
      %v957 = vadd.f32 %v672, %v956
      %v958 = vpop.f32.mrb[0].mxu0
      %959 = vmatprep.mubr.f32.mxu0 0.0
      %960 = vmatmul.mubr.f32.gmra.mrb[0].mxu0 %v750
      %v961 = vpop.f32.mrb[0].mxu0
      %v962 = vadd.f32 %v672, %v961
      %v963 = vpop.f32.mrb[0].mxu0
      %964 = vmatprep.mubr.f32.mxu0 0.0
      %965 = vmatmul.mubr.f32.gmra.mrb[0].mxu0 %v753
      %v966 = vpop.f32.mrb[0].mxu0
      %v967 = vadd.f32 %v672, %v966
      %v968 = vpop.f32.mrb[0].mxu0
      %969 = vmatprep.mubr.f32.mxu0 0.0
      %970 = vmatmul.mubr.f32.gmra.mrb[0].mxu0 %v756
      %v971 = vpop.f32.mrb[0].mxu0
      %v972 = vadd.f32 %v672, %v971
      %v973 = vpop.f32.mrb[0].mxu0
      %974 = vmatprep.mubr.f32.mxu0 0.0
      %975 = vmatmul.mubr.f32.gmra.mrb[0].mxu0 %v759
      %v976 = vpop.f32.mrb[0].mxu0
      %v977 = vadd.f32 %v672, %v976
      %v978 = vpop.f32.mrb[0].mxu0
      %979 = vmatprep.mubr.f32.mxu0 0.0
      %980 = vmatmul.mubr.f32.gmra.mrb[0].mxu0 %v762
      %v981 = vpop.f32.mrb[0].mxu0
      %v982 = vadd.f32 %v672, %v981
      %v983 = vpop.f32.mrb[0].mxu0
      %984 = vmatprep.mubr.f32.mxu0 0.0
      %985 = vmatmul.mubr.f32.gmra.mrb[0].mxu0 %v765
      %v986 = vpop.f32.mrb[0].mxu0
      %v987 = vadd.f32 %v672, %v986
      %v988 = vpop.f32.mrb[0].mxu0
      %989 = vmatprep.mubr.f32.mxu0 0.0
      %990 = vmatmul.mubr.f32.gmra.mrb[0].mxu0 %v768
      %v991 = vpop.f32.mrb[0].mxu0
      %v992 = vadd.f32 %v672, %v991
      %v993 = vpop.f32.mrb[0].mxu0
      %994 = vdwg.mxu0
      %v995 = vlaneseq
      %v996 = vand.u32 %v995, 127
      %vm997 = vcmp.ge.s32.totalorder %v996, 32
      %vm998 = vcmp.lt.s32.totalorder %v996, 48
      %vm999 = vmand %vm997, %vm998
      %v1000 = vsub.f32 0.0, %v837
      %v1001 = vsub.f32 0.0, %v842
      %v1002 = vsub.f32 0.0, %v847
      %v1003 = vsub.f32 0.0, %v852
      %v1004 = vsub.f32 0.0, %v857
      %v1005 = vsub.f32 0.0, %v862
      %v1006 = vsub.f32 0.0, %v867
      %v1007 = vsub.f32 0.0, %v872
      %v1008 = vsub.f32 0.0, %v877
      %v1009 = vsub.f32 0.0, %v882
      %v1010 = vsub.f32 0.0, %v887
      %v1011 = vsub.f32 0.0, %v892
      %v1012 = vsub.f32 0.0, %v897
      %v1013 = vsub.f32 0.0, %v902
      %v1014 = vsub.f32 0.0, %v907
      %v1015 = vsub.f32 0.0, %v912
      %v1016 = vsub.f32 0.0, %v917
      %v1017 = vsub.f32 0.0, %v922
      %v1018 = vsub.f32 0.0, %v927
      %v1019 = vsub.f32 0.0, %v932
      %v1020 = vsub.f32 0.0, %v937
      %v1021 = vsub.f32 0.0, %v942
      %v1022 = vsub.f32 0.0, %v947
      %v1023 = vsub.f32 0.0, %v952
      %v1024 = vsub.f32 0.0, %v957
      %v1025 = vsub.f32 0.0, %v962
      %v1026 = vsub.f32 0.0, %v967
      %v1027 = vsub.f32 0.0, %v972
      %v1028 = vsub.f32 0.0, %v977
      %v1029 = vsub.f32 0.0, %v982
      %v1030 = vsub.f32 0.0, %v987
      %v1031 = vsub.f32 0.0, %v992
      %v1032 = vmul.f32 %v1000, 1.442695
      %v1033 = vpow.pop %v1032
      %v1034 = vmul.f32 %v1001, 1.442695
      %v1035 = vpow.pop %v1034
      %v1036 = vmul.f32 %v1002, 1.442695
      %v1037 = vpow.pop %v1036
      %v1038 = vmul.f32 %v1003, 1.442695
      %v1039 = vpow.pop %v1038
      %v1040 = vmul.f32 %v1004, 1.442695
      %v1041 = vpow.pop %v1040
      %v1042 = vmul.f32 %v1005, 1.442695
      %v1043 = vpow.pop %v1042
      %v1044 = vmul.f32 %v1006, 1.442695
      %v1045 = vpow.pop %v1044
      %v1046 = vmul.f32 %v1007, 1.442695
      %v1047 = vpow.pop %v1046
      %v1048 = vmul.f32 %v1008, 1.442695
      %v1049 = vpow.pop %v1048
      %v1050 = vmul.f32 %v1009, 1.442695
      %v1051 = vpow.pop %v1050
      %v1052 = vmul.f32 %v1010, 1.442695
      %v1053 = vpow.pop %v1052
      %v1054 = vmul.f32 %v1011, 1.442695
      %v1055 = vpow.pop %v1054
      %v1056 = vmul.f32 %v1012, 1.442695
      %v1057 = vpow.pop %v1056
      %v1058 = vmul.f32 %v1013, 1.442695
      %v1059 = vpow.pop %v1058
      %v1060 = vmul.f32 %v1014, 1.442695
      %v1061 = vpow.pop %v1060
      %v1062 = vmul.f32 %v1015, 1.442695
      %v1063 = vpow.pop %v1062
      %v1064 = vmul.f32 %v1016, 1.442695
      %v1065 = vpow.pop %v1064
      %v1066 = vmul.f32 %v1017, 1.442695
      %v1067 = vpow.pop %v1066
      %v1068 = vmul.f32 %v1018, 1.442695
      %v1069 = vpow.pop %v1068
      %v1070 = vmul.f32 %v1019, 1.442695
      %v1071 = vpow.pop %v1070
      %v1072 = vmul.f32 %v1020, 1.442695
      %v1073 = vpow.pop %v1072
      %v1074 = vmul.f32 %v1021, 1.442695
      %v1075 = vpow.pop %v1074
      %v1076 = vmul.f32 %v1022, 1.442695
      %v1077 = vpow.pop %v1076
      %v1078 = vmul.f32 %v1023, 1.442695
      %v1079 = vpow.pop %v1078
      %v1080 = vmul.f32 %v1024, 1.442695
      %v1081 = vpow.pop %v1080
      %v1082 = vmul.f32 %v1025, 1.442695
      %v1083 = vpow.pop %v1082
      %v1084 = vmul.f32 %v1026, 1.442695
      %v1085 = vpow.pop %v1084
      %v1086 = vmul.f32 %v1027, 1.442695
      %v1087 = vpow.pop %v1086
      %v1088 = vmul.f32 %v1028, 1.442695
      %v1089 = vpow.pop %v1088
      %v1090 = vmul.f32 %v1029, 1.442695
      %v1091 = vpow.pop %v1090
      %v1092 = vmul.f32 %v1030, 1.442695
      %v1093 = vpow.pop %v1092
      %v1094 = vmul.f32 %v1031, 1.442695
      %v1095 = vpow.pop %v1094
      %v1096 = vadd.f32 %v1033, 1.0
      %v1097 = vadd.f32 %v1035, 1.0
      %v1098 = vadd.f32 %v1037, 1.0
      %v1099 = vadd.f32 %v1039, 1.0
      %v1100 = vadd.f32 %v1041, 1.0
      %v1101 = vadd.f32 %v1043, 1.0
      %v1102 = vadd.f32 %v1045, 1.0
      %v1103 = vadd.f32 %v1047, 1.0
      %v1104 = vadd.f32 %v1049, 1.0
      %v1105 = vadd.f32 %v1051, 1.0
      %v1106 = vadd.f32 %v1053, 1.0
      %v1107 = vadd.f32 %v1055, 1.0
      %v1108 = vadd.f32 %v1057, 1.0
      %v1109 = vadd.f32 %v1059, 1.0
      %v1110 = vadd.f32 %v1061, 1.0
      %v1111 = vadd.f32 %v1063, 1.0
      %v1112 = vadd.f32 %v1065, 1.0
      %v1113 = vadd.f32 %v1067, 1.0
      %v1114 = vadd.f32 %v1069, 1.0
      %v1115 = vadd.f32 %v1071, 1.0
      %v1116 = vadd.f32 %v1073, 1.0
      %v1117 = vadd.f32 %v1075, 1.0
      %v1118 = vadd.f32 %v1077, 1.0
      %v1119 = vadd.f32 %v1079, 1.0
      %v1120 = vadd.f32 %v1081, 1.0
      %v1121 = vadd.f32 %v1083, 1.0
      %v1122 = vadd.f32 %v1085, 1.0
      %v1123 = vadd.f32 %v1087, 1.0
      %v1124 = vadd.f32 %v1089, 1.0
      %v1125 = vadd.f32 %v1091, 1.0
      %v1126 = vadd.f32 %v1093, 1.0
      %v1127 = vadd.f32 %v1095, 1.0
      %v1128 = vrcp.pop %v1096
      %v1129 = vrcp.pop %v1097
      %v1130 = vrcp.pop %v1098
      %v1131 = vrcp.pop %v1099
      %v1132 = vrcp.pop %v1100
      %v1133 = vrcp.pop %v1101
      %v1134 = vrcp.pop %v1102
      %v1135 = vrcp.pop %v1103
      %v1136 = vrcp.pop %v1104
      %v1137 = vrcp.pop %v1105
      %v1138 = vrcp.pop %v1106
      %v1139 = vrcp.pop %v1107
      %v1140 = vrcp.pop %v1108
      %v1141 = vrcp.pop %v1109
      %v1142 = vrcp.pop %v1110
      %v1143 = vrcp.pop %v1111
      %v1144 = vrcp.pop %v1112
      %v1145 = vrcp.pop %v1113
      %v1146 = vrcp.pop %v1114
      %v1147 = vrcp.pop %v1115
      %v1148 = vrcp.pop %v1116
      %v1149 = vrcp.pop %v1117
      %v1150 = vrcp.pop %v1118
      %v1151 = vrcp.pop %v1119
      %v1152 = vrcp.pop %v1120
      %v1153 = vrcp.pop %v1121
      %v1154 = vrcp.pop %v1122
      %v1155 = vrcp.pop %v1123
      %v1156 = vrcp.pop %v1124
      %v1157 = vrcp.pop %v1125
      %v1158 = vrcp.pop %v1126
      %v1159 = vrcp.pop %v1127
      %v1160 = vmax.f32 %v837, 0.0
      %v1161 = vmax.f32 %v842, 0.0
      %v1162 = vmax.f32 %v847, 0.0
      %v1163 = vmax.f32 %v852, 0.0
      %v1164 = vmax.f32 %v857, 0.0
      %v1165 = vmax.f32 %v862, 0.0
      %v1166 = vmax.f32 %v867, 0.0
      %v1167 = vmax.f32 %v872, 0.0
      %v1168 = vmax.f32 %v877, 0.0
      %v1169 = vmax.f32 %v882, 0.0
      %v1170 = vmax.f32 %v887, 0.0
      %v1171 = vmax.f32 %v892, 0.0
      %v1172 = vmax.f32 %v897, 0.0
      %v1173 = vmax.f32 %v902, 0.0
      %v1174 = vmax.f32 %v907, 0.0
      %v1175 = vmax.f32 %v912, 0.0
      %v1176 = vmax.f32 %v917, 0.0
      %v1177 = vmax.f32 %v922, 0.0
      %v1178 = vmax.f32 %v927, 0.0
      %v1179 = vmax.f32 %v932, 0.0
      %v1180 = vmax.f32 %v937, 0.0
      %v1181 = vmax.f32 %v942, 0.0
      %v1182 = vmax.f32 %v947, 0.0
      %v1183 = vmax.f32 %v952, 0.0
      %v1184 = vmax.f32 %v957, 0.0
      %v1185 = vmax.f32 %v962, 0.0
      %v1186 = vmax.f32 %v967, 0.0
      %v1187 = vmax.f32 %v972, 0.0
      %v1188 = vmax.f32 %v977, 0.0
      %v1189 = vmax.f32 %v982, 0.0
      %v1190 = vmax.f32 %v987, 0.0
      %v1191 = vmax.f32 %v992, 0.0
      %v1192 = vsel %vm999, %v1128, %v1160
      %v1193 = vsel %vm999, %v1129, %v1161
      %v1194 = vsel %vm999, %v1130, %v1162
      %v1195 = vsel %vm999, %v1131, %v1163
      %v1196 = vsel %vm999, %v1132, %v1164
      %v1197 = vsel %vm999, %v1133, %v1165
      %v1198 = vsel %vm999, %v1134, %v1166
      %v1199 = vsel %vm999, %v1135, %v1167
      %v1200 = vsel %vm999, %v1136, %v1168
      %v1201 = vsel %vm999, %v1137, %v1169
      %v1202 = vsel %vm999, %v1138, %v1170
      %v1203 = vsel %vm999, %v1139, %v1171
      %v1204 = vsel %vm999, %v1140, %v1172
      %v1205 = vsel %vm999, %v1141, %v1173
      %v1206 = vsel %vm999, %v1142, %v1174
      %v1207 = vsel %vm999, %v1143, %v1175
      %v1208 = vsel %vm999, %v1144, %v1176
      %v1209 = vsel %vm999, %v1145, %v1177
      %v1210 = vsel %vm999, %v1146, %v1178
      %v1211 = vsel %vm999, %v1147, %v1179
      %v1212 = vsel %vm999, %v1148, %v1180
      %v1213 = vsel %vm999, %v1149, %v1181
      %v1214 = vsel %vm999, %v1150, %v1182
      %v1215 = vsel %vm999, %v1151, %v1183
      %v1216 = vsel %vm999, %v1152, %v1184
      %v1217 = vsel %vm999, %v1153, %v1185
      %v1218 = vsel %vm999, %v1154, %v1186
      %v1219 = vsel %vm999, %v1155, %v1187
      %v1220 = vsel %vm999, %v1156, %v1188
      %v1221 = vsel %vm999, %v1157, %v1189
      %v1222 = vsel %vm999, %v1158, %v1190
      %v1223 = vsel %vm999, %v1159, %v1191
      %v1224 = vld [vmem:[%s4] sm:$0xff]
      %v1225 = vld [vmem:[%s4 + $0x8] sm:$0xff]
      %v1226 = vld [vmem:[%s4 + $0x10] sm:$0xff]
      %v1227 = vld [vmem:[%s4 + $0x18] sm:$0xff]
      %v1228 = vld [vmem:[%s4 + $0x20] sm:$0xff]
      %v1229 = vld [vmem:[%s4 + $0x28] sm:$0xff]
      %v1230 = vld [vmem:[%s4 + $0x30] sm:$0xff]
      %v1231 = vld [vmem:[%s4 + $0x38] sm:$0xff]
      %v1232 = vld [vmem:[%s5] sm:$0x1]
      %v1234 = vlaneseq
      %v1235 = vshrl.u32 %v1234, 7
      %v1236 = vsub.s32 0, %v1235
      %v1237 = vrot.slane %v1232, %v1236
      %v1240 = vsel %vm673, %v1192, 0
      %v1243 = vsel %vm673, %v1193, 0
      %v1246 = vsel %vm673, %v1194, 0
      %v1249 = vsel %vm673, %v1195, 0
      %v1252 = vsel %vm673, %v1196, 0
      %v1255 = vsel %vm673, %v1197, 0
      %v1258 = vsel %vm673, %v1198, 0
      %v1261 = vsel %vm673, %v1199, 0
      %v1264 = vsel %vm673, %v1200, 0
      %v1267 = vsel %vm673, %v1201, 0
      %v1270 = vsel %vm673, %v1202, 0
      %v1273 = vsel %vm673, %v1203, 0
      %v1276 = vsel %vm673, %v1204, 0
      %v1279 = vsel %vm673, %v1205, 0
      %v1282 = vsel %vm673, %v1206, 0
      %v1285 = vsel %vm673, %v1207, 0
      %v1288 = vsel %vm673, %v1208, 0
      %v1291 = vsel %vm673, %v1209, 0
      %v1294 = vsel %vm673, %v1210, 0
      %v1297 = vsel %vm673, %v1211, 0
      %v1300 = vsel %vm673, %v1212, 0
      %v1303 = vsel %vm673, %v1213, 0
      %v1306 = vsel %vm673, %v1214, 0
      %v1309 = vsel %vm673, %v1215, 0
      %v1312 = vsel %vm673, %v1216, 0
      %v1315 = vsel %vm673, %v1217, 0
      %v1318 = vsel %vm673, %v1218, 0
      %v1321 = vsel %vm673, %v1219, 0
      %v1324 = vsel %vm673, %v1220, 0
      %v1327 = vsel %vm673, %v1221, 0
      %v1330 = vsel %vm673, %v1222, 0
      %v1333 = vsel %vm673, %v1223, 0
      %1335 = vmatprep.subr.mxu0 0.0
      %1336 = vmatpush1.msra.mxu0 %v1224
      %1337 = vmatprep.subr.mxu0 0.0
      %1338 = vmatpush1.msra.mxu0 %v1225
      %1339 = vmatprep.subr.mxu0 0.0
      %1340 = vmatpush1.msra.mxu0 %v1226
      %1341 = vmatprep.subr.mxu0 0.0
      %1342 = vmatpush1.msra.mxu0 %v1227
      %1343 = vmatprep.subr.mxu0 0.0
      %1344 = vmatpush1.msra.mxu0 %v1228
      %1345 = vmatprep.subr.mxu0 0.0
      %1346 = vmatpush1.msra.mxu0 %v1229
      %1347 = vmatprep.subr.mxu0 0.0
      %1348 = vmatpush1.msra.mxu0 %v1230
      %1349 = vmatprep.subr.mxu0 0.0
      %1350 = vmatpush1.msra.mxu0 %v1231
      %1351 = vmatprep.subr.mxu0 0.0
      %1352 = vmatpush1.msra.mxu0 0.0
      %1353 = vmatprep.subr.mxu0 0.0
      %1354 = vmatpush1.msra.mxu0 0.0
      %1355 = vmatprep.subr.mxu0 0.0
      %1356 = vmatpush1.msra.mxu0 0.0
      %1357 = vmatprep.subr.mxu0 0.0
      %1358 = vmatpush1.msra.mxu0 0.0
      %1359 = vmatprep.subr.mxu0 0.0
      %1360 = vmatpush1.msra.mxu0 0.0
      %1361 = vmatprep.subr.mxu0 0.0
      %1362 = vmatpush1.msra.mxu0 0.0
      %1363 = vmatprep.subr.mxu0 0.0
      %1364 = vmatpush1.msra.mxu0 0.0
      %1365 = vmatprep.subr.mxu0 0.0
      %1366 = vmatpush1.msra.mxu0 0.0
      %1367 = vmatprep.subr.mxu0 0.0
      %1368 = vmatpush1.msra.mxu0 0.0
      %1369 = vmatprep.subr.mxu0 0.0
      %1370 = vmatpush1.msra.mxu0 0.0
      %1371 = vmatprep.subr.mxu0 0.0
      %1372 = vmatpush1.msra.mxu0 0.0
      %1373 = vmatprep.subr.mxu0 0.0
      %1374 = vmatpush1.msra.mxu0 0.0
      %1375 = vmatprep.subr.mxu0 0.0
      %1376 = vmatpush1.msra.mxu0 0.0
      %1377 = vmatprep.subr.mxu0 0.0
      %1378 = vmatpush1.msra.mxu0 0.0
      %1379 = vmatprep.subr.mxu0 0.0
      %1380 = vmatpush1.msra.mxu0 0.0
      %1381 = vmatprep.subr.mxu0 0.0
      %1382 = vmatpush1.msra.mxu0 0.0
      %1383 = vmatprep.subr.mxu0 0.0
      %1384 = vmatpush1.msra.mxu0 0.0
      %1385 = vmatprep.subr.mxu0 0.0
      %1386 = vmatpush1.msra.mxu0 0.0
      %1387 = vmatprep.subr.mxu0 0.0
      %1388 = vmatpush1.msra.mxu0 0.0
      %1389 = vmatprep.subr.mxu0 0.0
      %1390 = vmatpush1.msra.mxu0 0.0
      %1391 = vmatprep.subr.mxu0 0.0
      %1392 = vmatpush1.msra.mxu0 0.0
      %1393 = vmatprep.subr.mxu0 0.0
      %1394 = vmatpush1.msra.mxu0 0.0
      %1395 = vmatprep.subr.mxu0 0.0
      %1396 = vmatpush1.msra.mxu0 0.0
      %1397 = vmatprep.subr.mxu0 0.0
      %1398 = vmatpush1.msra.mxu0 0.0
      %1399 = vmatprep.mubr.f32.mxu0 0.0
      %1400 = vmatmul.mubr.f32.gmra.mrb[0].mxu0 %v1240
      %v1401 = vpop.f32.mrb[0].mxu0
      %v1402 = vadd.f32 %v1237, %v1401
      %v1403 = vpop.f32.mrb[0].mxu0
      %1404 = vmatprep.mubr.f32.mxu0 0.0
      %1405 = vmatmul.mubr.f32.gmra.mrb[0].mxu0 %v1243
      %v1406 = vpop.f32.mrb[0].mxu0
      %v1407 = vadd.f32 %v1237, %v1406
      %v1408 = vpop.f32.mrb[0].mxu0
      %1409 = vmatprep.mubr.f32.mxu0 0.0
      %1410 = vmatmul.mubr.f32.gmra.mrb[0].mxu0 %v1246
      %v1411 = vpop.f32.mrb[0].mxu0
      %v1412 = vadd.f32 %v1237, %v1411
      %v1413 = vpop.f32.mrb[0].mxu0
      %1414 = vmatprep.mubr.f32.mxu0 0.0
      %1415 = vmatmul.mubr.f32.gmra.mrb[0].mxu0 %v1249
      %v1416 = vpop.f32.mrb[0].mxu0
      %v1417 = vadd.f32 %v1237, %v1416
      %v1418 = vpop.f32.mrb[0].mxu0
      %1419 = vmatprep.mubr.f32.mxu0 0.0
      %1420 = vmatmul.mubr.f32.gmra.mrb[0].mxu0 %v1252
      %v1421 = vpop.f32.mrb[0].mxu0
      %v1422 = vadd.f32 %v1237, %v1421
      %v1423 = vpop.f32.mrb[0].mxu0
      %1424 = vmatprep.mubr.f32.mxu0 0.0
      %1425 = vmatmul.mubr.f32.gmra.mrb[0].mxu0 %v1255
      %v1426 = vpop.f32.mrb[0].mxu0
      %v1427 = vadd.f32 %v1237, %v1426
      %v1428 = vpop.f32.mrb[0].mxu0
      %1429 = vmatprep.mubr.f32.mxu0 0.0
      %1430 = vmatmul.mubr.f32.gmra.mrb[0].mxu0 %v1258
      %v1431 = vpop.f32.mrb[0].mxu0
      %v1432 = vadd.f32 %v1237, %v1431
      %v1433 = vpop.f32.mrb[0].mxu0
      %1434 = vmatprep.mubr.f32.mxu0 0.0
      %1435 = vmatmul.mubr.f32.gmra.mrb[0].mxu0 %v1261
      %v1436 = vpop.f32.mrb[0].mxu0
      %v1437 = vadd.f32 %v1237, %v1436
      %v1438 = vpop.f32.mrb[0].mxu0
      %1439 = vmatprep.mubr.f32.mxu0 0.0
      %1440 = vmatmul.mubr.f32.gmra.mrb[0].mxu0 %v1264
      %v1441 = vpop.f32.mrb[0].mxu0
      %v1442 = vadd.f32 %v1237, %v1441
      %v1443 = vpop.f32.mrb[0].mxu0
      %1444 = vmatprep.mubr.f32.mxu0 0.0
      %1445 = vmatmul.mubr.f32.gmra.mrb[0].mxu0 %v1267
      %v1446 = vpop.f32.mrb[0].mxu0
      %v1447 = vadd.f32 %v1237, %v1446
      %v1448 = vpop.f32.mrb[0].mxu0
      %1449 = vmatprep.mubr.f32.mxu0 0.0
      %1450 = vmatmul.mubr.f32.gmra.mrb[0].mxu0 %v1270
      %v1451 = vpop.f32.mrb[0].mxu0
      %v1452 = vadd.f32 %v1237, %v1451
      %v1453 = vpop.f32.mrb[0].mxu0
      %1454 = vmatprep.mubr.f32.mxu0 0.0
      %1455 = vmatmul.mubr.f32.gmra.mrb[0].mxu0 %v1273
      %v1456 = vpop.f32.mrb[0].mxu0
      %v1457 = vadd.f32 %v1237, %v1456
      %v1458 = vpop.f32.mrb[0].mxu0
      %1459 = vmatprep.mubr.f32.mxu0 0.0
      %1460 = vmatmul.mubr.f32.gmra.mrb[0].mxu0 %v1276
      %v1461 = vpop.f32.mrb[0].mxu0
      %v1462 = vadd.f32 %v1237, %v1461
      %v1463 = vpop.f32.mrb[0].mxu0
      %1464 = vmatprep.mubr.f32.mxu0 0.0
      %1465 = vmatmul.mubr.f32.gmra.mrb[0].mxu0 %v1279
      %v1466 = vpop.f32.mrb[0].mxu0
      %v1467 = vadd.f32 %v1237, %v1466
      %v1468 = vpop.f32.mrb[0].mxu0
      %1469 = vmatprep.mubr.f32.mxu0 0.0
      %1470 = vmatmul.mubr.f32.gmra.mrb[0].mxu0 %v1282
      %v1471 = vpop.f32.mrb[0].mxu0
      %v1472 = vadd.f32 %v1237, %v1471
      %v1473 = vpop.f32.mrb[0].mxu0
      %1474 = vmatprep.mubr.f32.mxu0 0.0
      %1475 = vmatmul.mubr.f32.gmra.mrb[0].mxu0 %v1285
      %v1476 = vpop.f32.mrb[0].mxu0
      %v1477 = vadd.f32 %v1237, %v1476
      %v1478 = vpop.f32.mrb[0].mxu0
      %1479 = vmatprep.mubr.f32.mxu0 0.0
      %1480 = vmatmul.mubr.f32.gmra.mrb[0].mxu0 %v1288
      %v1481 = vpop.f32.mrb[0].mxu0
      %v1482 = vadd.f32 %v1237, %v1481
      %v1483 = vpop.f32.mrb[0].mxu0
      %1484 = vmatprep.mubr.f32.mxu0 0.0
      %1485 = vmatmul.mubr.f32.gmra.mrb[0].mxu0 %v1291
      %v1486 = vpop.f32.mrb[0].mxu0
      %v1487 = vadd.f32 %v1237, %v1486
      %v1488 = vpop.f32.mrb[0].mxu0
      %1489 = vmatprep.mubr.f32.mxu0 0.0
      %1490 = vmatmul.mubr.f32.gmra.mrb[0].mxu0 %v1294
      %v1491 = vpop.f32.mrb[0].mxu0
      %v1492 = vadd.f32 %v1237, %v1491
      %v1493 = vpop.f32.mrb[0].mxu0
      %1494 = vmatprep.mubr.f32.mxu0 0.0
      %1495 = vmatmul.mubr.f32.gmra.mrb[0].mxu0 %v1297
      %v1496 = vpop.f32.mrb[0].mxu0
      %v1497 = vadd.f32 %v1237, %v1496
      %v1498 = vpop.f32.mrb[0].mxu0
      %1499 = vmatprep.mubr.f32.mxu0 0.0
      %1500 = vmatmul.mubr.f32.gmra.mrb[0].mxu0 %v1300
      %v1501 = vpop.f32.mrb[0].mxu0
      %v1502 = vadd.f32 %v1237, %v1501
      %v1503 = vpop.f32.mrb[0].mxu0
      %1504 = vmatprep.mubr.f32.mxu0 0.0
      %1505 = vmatmul.mubr.f32.gmra.mrb[0].mxu0 %v1303
      %v1506 = vpop.f32.mrb[0].mxu0
      %v1507 = vadd.f32 %v1237, %v1506
      %v1508 = vpop.f32.mrb[0].mxu0
      %1509 = vmatprep.mubr.f32.mxu0 0.0
      %1510 = vmatmul.mubr.f32.gmra.mrb[0].mxu0 %v1306
      %v1511 = vpop.f32.mrb[0].mxu0
      %v1512 = vadd.f32 %v1237, %v1511
      %v1513 = vpop.f32.mrb[0].mxu0
      %1514 = vmatprep.mubr.f32.mxu0 0.0
      %1515 = vmatmul.mubr.f32.gmra.mrb[0].mxu0 %v1309
      %v1516 = vpop.f32.mrb[0].mxu0
      %v1517 = vadd.f32 %v1237, %v1516
      %v1518 = vpop.f32.mrb[0].mxu0
      %1519 = vmatprep.mubr.f32.mxu0 0.0
      %1520 = vmatmul.mubr.f32.gmra.mrb[0].mxu0 %v1312
      %v1521 = vpop.f32.mrb[0].mxu0
      %v1522 = vadd.f32 %v1237, %v1521
      %v1523 = vpop.f32.mrb[0].mxu0
      %1524 = vmatprep.mubr.f32.mxu0 0.0
      %1525 = vmatmul.mubr.f32.gmra.mrb[0].mxu0 %v1315
      %v1526 = vpop.f32.mrb[0].mxu0
      %v1527 = vadd.f32 %v1237, %v1526
      %v1528 = vpop.f32.mrb[0].mxu0
      %1529 = vmatprep.mubr.f32.mxu0 0.0
      %1530 = vmatmul.mubr.f32.gmra.mrb[0].mxu0 %v1318
      %v1531 = vpop.f32.mrb[0].mxu0
      %v1532 = vadd.f32 %v1237, %v1531
      %v1533 = vpop.f32.mrb[0].mxu0
      %1534 = vmatprep.mubr.f32.mxu0 0.0
      %1535 = vmatmul.mubr.f32.gmra.mrb[0].mxu0 %v1321
      %v1536 = vpop.f32.mrb[0].mxu0
      %v1537 = vadd.f32 %v1237, %v1536
      %v1538 = vpop.f32.mrb[0].mxu0
      %1539 = vmatprep.mubr.f32.mxu0 0.0
      %1540 = vmatmul.mubr.f32.gmra.mrb[0].mxu0 %v1324
      %v1541 = vpop.f32.mrb[0].mxu0
      %v1542 = vadd.f32 %v1237, %v1541
      %v1543 = vpop.f32.mrb[0].mxu0
      %1544 = vmatprep.mubr.f32.mxu0 0.0
      %1545 = vmatmul.mubr.f32.gmra.mrb[0].mxu0 %v1327
      %v1546 = vpop.f32.mrb[0].mxu0
      %v1547 = vadd.f32 %v1237, %v1546
      %v1548 = vpop.f32.mrb[0].mxu0
      %1549 = vmatprep.mubr.f32.mxu0 0.0
      %1550 = vmatmul.mubr.f32.gmra.mrb[0].mxu0 %v1330
      %v1551 = vpop.f32.mrb[0].mxu0
      %v1552 = vadd.f32 %v1237, %v1551
      %v1553 = vpop.f32.mrb[0].mxu0
      %1554 = vmatprep.mubr.f32.mxu0 0.0
      %1555 = vmatmul.mubr.f32.gmra.mrb[0].mxu0 %v1333
      %v1556 = vpop.f32.mrb[0].mxu0
      %v1557 = vadd.f32 %v1237, %v1556
      %v1558 = vpop.f32.mrb[0].mxu0
      %1559 = vdwg.mxu0
      %vm1560 = vcmask 15360
      %1561 = vst.msk [vmem:[%s253] sm:$0xff] %vm1560, %v1402
      %1562 = vst.msk [vmem:[%s253 + $0x8] sm:$0xff] %vm1560, %v1407
      %1563 = vst.msk [vmem:[%s253 + $0x10] sm:$0xff] %vm1560, %v1412
      %1564 = vst.msk [vmem:[%s253 + $0x18] sm:$0xff] %vm1560, %v1417
      %1565 = vst.msk [vmem:[%s253 + $0x20] sm:$0xff] %vm1560, %v1422
      %1566 = vst.msk [vmem:[%s253 + $0x28] sm:$0xff] %vm1560, %v1427
      %1567 = vst.msk [vmem:[%s253 + $0x30] sm:$0xff] %vm1560, %v1432
      %1568 = vst.msk [vmem:[%s253 + $0x38] sm:$0xff] %vm1560, %v1437
      %1569 = vst.msk [vmem:[%s253 + $0x40] sm:$0xff] %vm1560, %v1442
      %1570 = vst.msk [vmem:[%s253 + $0x48] sm:$0xff] %vm1560, %v1447
      %1571 = vst.msk [vmem:[%s253 + $0x50] sm:$0xff] %vm1560, %v1452
      %1572 = vst.msk [vmem:[%s253 + $0x58] sm:$0xff] %vm1560, %v1457
      %1573 = vst.msk [vmem:[%s253 + $0x60] sm:$0xff] %vm1560, %v1462
      %1574 = vst.msk [vmem:[%s253 + $0x68] sm:$0xff] %vm1560, %v1467
      %1575 = vst.msk [vmem:[%s253 + $0x70] sm:$0xff] %vm1560, %v1472
      %1576 = vst.msk [vmem:[%s253 + $0x78] sm:$0xff] %vm1560, %v1477
      %1577 = vst.msk [vmem:[%s253 + $0x80] sm:$0xff] %vm1560, %v1482
      %1578 = vst.msk [vmem:[%s253 + $0x88] sm:$0xff] %vm1560, %v1487
      %1579 = vst.msk [vmem:[%s253 + $0x90] sm:$0xff] %vm1560, %v1492
      %1580 = vst.msk [vmem:[%s253 + $0x98] sm:$0xff] %vm1560, %v1497
      %1581 = vst.msk [vmem:[%s253 + $0xa0] sm:$0xff] %vm1560, %v1502
      %1582 = vst.msk [vmem:[%s253 + $0xa8] sm:$0xff] %vm1560, %v1507
      %1583 = vst.msk [vmem:[%s253 + $0xb0] sm:$0xff] %vm1560, %v1512
      %1584 = vst.msk [vmem:[%s253 + $0xb8] sm:$0xff] %vm1560, %v1517
      %1585 = vst.msk [vmem:[%s253 + $0xc0] sm:$0xff] %vm1560, %v1522
      %1586 = vst.msk [vmem:[%s253 + $0xc8] sm:$0xff] %vm1560, %v1527
      %1587 = vst.msk [vmem:[%s253 + $0xd0] sm:$0xff] %vm1560, %v1532
      %1588 = vst.msk [vmem:[%s253 + $0xd8] sm:$0xff] %vm1560, %v1537
      %1589 = vst.msk [vmem:[%s253 + $0xe0] sm:$0xff] %vm1560, %v1542
      %1590 = vst.msk [vmem:[%s253 + $0xe8] sm:$0xff] %vm1560, %v1547
      %1591 = vst.msk [vmem:[%s253 + $0xf0] sm:$0xff] %vm1560, %v1552
      %1592 = vst.msk [vmem:[%s253 + $0xf8] sm:$0xff] %vm1560, %v1557
      %s1593 = smul.u32 32, %s17
      %p1594 = scmp.lt.s32.totalorder %s1593, 63
      %s1595 = scalar_select %p1594, %s1593, 63
      %s1596 = smul.addr %s1595, 8
      %s1597 = scalar_lea.vmem %s6, %s1596
      // Predicated region
      $region45: #{tpu_custom_call.1} parent=43 // pred_check
        %p1598 = pneg %p166
      $region46: #{tpu_custom_call.1} parent=43 // pred_check_branch
        %1600 = sbr.rel (%p1598) target = $region48
      $region47: #{tpu_custom_call.1} parent=43 // pred_region
        %s1601 = smul.u32 32, %s17
      $region48: #{tpu_custom_call.1} parent=43 // pred_fallthru
        _
    $region44: #{tpu_custom_call.1} parent=5 // pred_fallthru
      _
    %p1602 = scmp.le.s32.totalorder 2, %s12
    // Predicated region
    $region49: #{tpu_custom_call.1} parent=5 // pred_check
      %p1603 = pneg %p1602
    $region50: #{tpu_custom_call.1} parent=5 // pred_check_branch
      %1605 = sbr.rel (%p1603) target = $region52
    $region51: #{tpu_custom_call.1} parent=5 // pred_region
      %s1606 = ssub.s32 %s12, 2
      // Predicated region
      $region53: #{tpu_custom_call.1} parent=51 // pred_check
        %p1607 = pneg %p172
      $region54: #{tpu_custom_call.1} parent=51 // pred_check_branch
        %1609 = sbr.rel (%p1607) target = $region56
      $region55: #{tpu_custom_call.1} parent=51 // pred_region
        %s1610 = smul.u32 32, %s18
        %p1611 = scmp.lt.s32.totalorder %s1610, 63
        %s1612 = scalar_select %p1611, %s1610, 63
        %s1613 = smul.addr %s1612, 8
        %s1614 = scalar_lea.vmem %s6, %s1613
      $region56: #{tpu_custom_call.1} parent=51 // pred_fallthru
        _
    $region52: #{tpu_custom_call.1} parent=5 // pred_fallthru
      _
  $region6: #{tpu_custom_call.1} parent=0 // loop_footer
    %s16 = sadd.s32 1, %s12
  $region7: #{tpu_custom_call.1} parent=0 // loop_footer_branch
    %11 = sbr.rel target = $region3
  $region8: #{tpu_custom_call.1} parent=0 // loop_exit
    _

</llo_original>
